<compile_context>
chip_gen: v6e
topology: v6e:2x2x1
jax: 0.10.0
libtpu: 0.0.40
codegen_flags: <defaults>
</compile_context>

<pallas_src>
import jax
import jax.numpy as jnp
from jax.experimental import pallas as pl
from jax.experimental.pallas import tpu as pltpu

WRAPPED_ACTION_DIM = 40
WRAPPED_STATE_DIM = 560
HIDDEN_DIM = 450

LEAKY_SLOPE = 0.01          # nn.LeakyReLU default negative_slope
LANE = 128
SUBLANE = 8
DEFAULT_TILE_B = 1024       # v5e-safe; v6e/v7x could go to 2048
COMPUTE_DTYPE = jnp.bfloat16  # MXU operand dtype (accumulation stays f32)


def _round_up(n, m):
    return ((n + m - 1) // m) * m


def _leaky(v):
    return jnp.where(v >= 0, v, LEAKY_SLOPE * v)


def agent_m4_kernel(x_ref,
                    w1_ref, b1_ref,
                    w2_ref, b2_ref,
                    w3_ref, b3_ref,
                    w4_ref, b4_ref,
                    o_ref):
    # One batch tile per grid step; weights/biases are resident in VMEM
    # (constant index_map).  Matmuls use low-precision operands with f32
    # accumulation; the element-wise tail (bias / leaky-ReLU / clip) is f32.
    cdt = w1_ref.dtype
    h = jnp.dot(x_ref[...].astype(cdt), w1_ref[...],
                preferred_element_type=jnp.float32) + b1_ref[...]
    h = _leaky(h)
    h = jnp.dot(h.astype(cdt), w2_ref[...],
                preferred_element_type=jnp.float32) + b2_ref[...]
    h = _leaky(h)
    h = jnp.dot(h.astype(cdt), w3_ref[...],
                preferred_element_type=jnp.float32) + b3_ref[...]
    h = _leaky(h)
    out = jnp.dot(h.astype(cdt), w4_ref[...],
                  preferred_element_type=jnp.float32) + b4_ref[...]
    o_ref[...] = jnp.clip(out, -10.0, 10.0).astype(o_ref.dtype)


def _pad_params(params, compute_dtype):
    """Zero-pad output dims (and matching input dims of later layers) to 128.

    fc1's input dim stays at 560: K needs no lane padding (ceil(560/128) MXU
    passes either way) and leaving it alone lets x be fed to the kernel with
    no extra HBM copy.  Zero padding is exact through bias/leaky-ReLU/clip.
    Weights are cast once to the matmul operand dtype; biases stay f32.
    """
    padded = {}
    for i in range(1, 5):
        w = params[f"w{i}"].astype(jnp.float32)
        b = params[f"b{i}"].astype(jnp.float32).reshape(1, -1)
        din, dout = w.shape
        pin = din if i == 1 else _round_up(din, LANE)
        pout = _round_up(dout, LANE)
        wp = jnp.zeros((pin, pout), jnp.float32).at[:din, :dout].set(w)
        bp = jnp.zeros((1, pout), jnp.float32).at[:, :dout].set(b)
        padded[f"w{i}"] = wp.astype(compute_dtype)
        padded[f"b{i}"] = bp
    return padded


def agent_m4_forward(x, params, *, tile_b=DEFAULT_TILE_B,
                     compute_dtype=COMPUTE_DTYPE):
    """x: (..., state_dim); params: dict w1..w4 (in,out) / b1..b4 (1,out), unpadded.

    Matches the PyTorch module: flattens leading dims, returns (N, action_dim).
    """
    state_dim = params["w1"].shape[0]
    action_dim = params["w4"].shape[1]
    x2d = x.reshape(-1, state_dim)          # no copy; dtype cast happens in-kernel
    B = x2d.shape[0]

    pp = _pad_params(params, compute_dtype)
    d_h1 = pp["w1"].shape[1]
    d_h2 = pp["w2"].shape[1]
    d_h3 = pp["w3"].shape[1]
    d_out = pp["w4"].shape[1]

    # Batch tile: multiple of 8 (sublane).  No batch padding: grid uses cdiv
    # and Pallas masks the boundary block (garbage rows are row-independent,
    # their stores are discarded).
    tb = min(tile_b, _round_up(B, SUBLANE))
    tb = max(SUBLANE, _round_up(tb, SUBLANE))
    if B > 2 * SUBLANE:
        # Keep >= 2 grid steps so v7x megacore can shard the batch axis.
        tb = max(SUBLANE, min(tb, _round_up(pl.cdiv(B, 2), SUBLANE)))
    grid = (pl.cdiv(B, tb),)

    def resident(shape):
        # Full-array block, constant index_map -> DMA'd once, stays in VMEM.
        return pl.BlockSpec(shape, lambda i: (0, 0))

    w_itemsize = jnp.dtype(compute_dtype).itemsize
    w_elems = (state_dim * d_h1 + d_h1 * d_h2 + d_h2 * d_h3 + d_h3 * d_out)
    flops = 2 * B * w_elems
    bytes_accessed = (x2d.dtype.itemsize * B * state_dim    # x read
                      + 4 * B * d_out                        # out write (f32)
                      + w_itemsize * w_elems                 # weights
                      + 4 * (d_h1 + d_h2 + d_h3 + d_out))    # biases (f32)

    out_p = pl.pallas_call(
        agent_m4_kernel,
        out_shape=jax.ShapeDtypeStruct((B, d_out), jnp.float32),
        grid=grid,
        in_specs=[
            pl.BlockSpec((tb, state_dim), lambda i: (i, 0)),   # x: tiled over batch
            resident((state_dim, d_h1)), resident((1, d_h1)),  # fc1
            resident((d_h1, d_h2)), resident((1, d_h2)),       # fc2
            resident((d_h2, d_h3)), resident((1, d_h3)),       # fc3
            resident((d_h3, d_out)), resident((1, d_out)),     # fc4
        ],
        out_specs=pl.BlockSpec((tb, d_out), lambda i: (i, 0)),
        compiler_params=pltpu.CompilerParams(
            dimension_semantics=("parallel",),
            vmem_limit_bytes=32 * 1024 * 1024),
        cost_estimate=pl.CostEstimate(
            flops=flops, transcendentals=0, bytes_accessed=bytes_accessed),
    )(x2d,
      pp["w1"], pp["b1"],
      pp["w2"], pp["b2"],
      pp["w3"], pp["b3"],
      pp["w4"], pp["b4"])

    return out_p[:, :action_dim]


def init_params(key, state_dim=WRAPPED_STATE_DIM, hidden_dim=HIDDEN_DIM,
                action_dim=WRAPPED_ACTION_DIM):
    """Deterministic init mimicking nn.Linear (uniform(-1/sqrt(fan_in), ...))."""
    dims = [state_dim, hidden_dim, hidden_dim * 2 // 3, hidden_dim // 3, action_dim]
    params = {}
    keys = jax.random.split(key, 2 * (len(dims) - 1))
    for i in range(len(dims) - 1):
        fan_in, fan_out = dims[i], dims[i + 1]
        bound = 1.0 / jnp.sqrt(jnp.float32(fan_in))
        w = jax.random.uniform(keys[2 * i], (fan_in, fan_out),
                               minval=-bound, maxval=bound, dtype=jnp.float32)
        b = jax.random.uniform(keys[2 * i + 1], (1, fan_out),
                               minval=-bound, maxval=bound, dtype=jnp.float32)
        params[f"w{i + 1}"] = w
        params[f"b{i + 1}"] = b
    return params


def reference_forward(x, params):
    """Pure-JAX f32 reference for correctness checks."""
    h = x.reshape(-1, params["w1"].shape[0]).astype(jnp.float32)
    for i in range(1, 4):
        h = h @ params[f"w{i}"] + params[f"b{i}"]
        h = jnp.where(h >= 0, h, LEAKY_SLOPE * h)
    out = h @ params["w4"] + params["b4"]
    return jnp.clip(out, -10.0, 10.0)


if __name__ == "__main__":
    key = jax.random.PRNGKey(0)
    k_params, k_x1, k_x2 = jax.random.split(key, 3)

    params = init_params(k_params)

    # Check 1: f32 compute path, tight tolerance (validates kernel structure,
    # padding, and boundary-block masking exactly).
    batch = 2
    x = jax.random.normal(k_x1, (batch, WRAPPED_STATE_DIM), dtype=jnp.float32)
    ref = reference_forward(x, params)
    out_f32 = jax.block_until_ready(
        agent_m4_forward(x, params, compute_dtype=jnp.float32))
    assert out_f32.shape == (batch, WRAPPED_ACTION_DIM), out_f32.shape
    assert jnp.allclose(out_f32, ref, atol=1e-4, rtol=1e-4), \
        "mismatch vs reference (f32 path, batch=2)"

    # Check 2: default bf16 MXU operands, small batch (single partial block).
    out_bf16 = jax.block_until_ready(agent_m4_forward(x, params))
    assert out_bf16.shape == (batch, WRAPPED_ACTION_DIM), out_bf16.shape
    assert jnp.allclose(out_bf16, ref, atol=5e-2, rtol=5e-2), \
        "mismatch vs reference (bf16 path, batch=2)"

    # Check 3: default bf16, multi-step grid with a masked boundary block
    # (B=200 -> tb=104, grid=(2,), last block partially out of bounds).
    batch2 = 200
    x2 = jax.random.normal(k_x2, (batch2, WRAPPED_STATE_DIM), dtype=jnp.float32)
    out2 = jax.block_until_ready(agent_m4_forward(x2, params))
    ref2 = reference_forward(x2, params)
    assert out2.shape == (batch2, WRAPPED_ACTION_DIM), out2.shape
    assert jnp.allclose(out2, ref2, atol=5e-2, rtol=5e-2), \
        "mismatch vs reference (bf16 path, batch=200)"

    print("KERNEL_OK")
</pallas_src>

<mosaic_0001>
module attributes {stable_mosaic.version = 11 : i64} {
  func.func @agent_m4_kernel(%arg0: i32, %arg1: memref<8x560xf32, #tpu.memory_space<vmem>>, %arg2: memref<560x512xf32, #tpu.memory_space<vmem>>, %arg3: memref<1x512xf32, #tpu.memory_space<vmem>>, %arg4: memref<512x384xf32, #tpu.memory_space<vmem>>, %arg5: memref<1x384xf32, #tpu.memory_space<vmem>>, %arg6: memref<384x256xf32, #tpu.memory_space<vmem>>, %arg7: memref<1x256xf32, #tpu.memory_space<vmem>>, %arg8: memref<256x128xf32, #tpu.memory_space<vmem>>, %arg9: memref<1x128xf32, #tpu.memory_space<vmem>>, %arg10: memref<8x128xf32, #tpu.memory_space<vmem>>) attributes {dimension_semantics = [#tpu.dimension_semantics<parallel>], iteration_bounds = array<i64: 1>, scalar_prefetch = 0 : i64, scratch_operands = 0 : i64, tpu.core_type = #tpu.core_type<tc>, window_params = [{transform_indices = @transform_0, window_bounds = array<i64: 8, 560>}, {pipeline_mode = #tpu.pipeline_mode<synchronous>, transform_indices = @transform_1, window_bounds = array<i64: 560, 512>}, {pipeline_mode = #tpu.pipeline_mode<synchronous>, transform_indices = @transform_2, window_bounds = array<i64: 1, 512>}, {pipeline_mode = #tpu.pipeline_mode<synchronous>, transform_indices = @transform_3, window_bounds = array<i64: 512, 384>}, {pipeline_mode = #tpu.pipeline_mode<synchronous>, transform_indices = @transform_4, window_bounds = array<i64: 1, 384>}, {pipeline_mode = #tpu.pipeline_mode<synchronous>, transform_indices = @transform_5, window_bounds = array<i64: 384, 256>}, {pipeline_mode = #tpu.pipeline_mode<synchronous>, transform_indices = @transform_6, window_bounds = array<i64: 1, 256>}, {pipeline_mode = #tpu.pipeline_mode<synchronous>, transform_indices = @transform_7, window_bounds = array<i64: 256, 128>}, {pipeline_mode = #tpu.pipeline_mode<synchronous>, transform_indices = @transform_8, window_bounds = array<i64: 1, 128>}, {transform_indices = @transform_9, window_bounds = array<i64: 8, 128>}]} {
    %c0 = arith.constant 0 : index
    %c0_0 = arith.constant 0 : index
    %0 = vector.load %arg1[%c0, %c0_0] : memref<8x560xf32, #tpu.memory_space<vmem>>, vector<8x560xf32>
    %c0_1 = arith.constant 0 : index
    %c0_2 = arith.constant 0 : index
    %1 = vector.load %arg2[%c0_1, %c0_2] : memref<560x512xf32, #tpu.memory_space<vmem>>, vector<560x512xf32>
    %cst = arith.constant dense<0.000000e+00> : vector<8x512xf32>
    %2 = tpu.matmul %0, %1, %cst {dimension_numbers = #tpu.dot_dimension_numbers<[1], [0], [0], [1], [0, 0, 1, 1], [], []>} : vector<8x560xf32>, vector<560x512xf32>, vector<8x512xf32> -> vector<8x512xf32>
    %c0_3 = arith.constant 0 : index
    %c0_4 = arith.constant 0 : index
    %3 = vector.load %arg3[%c0_3, %c0_4] : memref<1x512xf32, #tpu.memory_space<vmem>>, vector<1x512xf32>
    %4 = vector.broadcast %3 : vector<1x512xf32> to vector<8x512xf32>
    %5 = arith.addf %2, %4 : vector<8x512xf32>
    %cst_5 = arith.constant 0.000000e+00 : f32
    %6 = vector.broadcast %cst_5 : f32 to vector<8x512xf32>
    %7 = arith.cmpf oge, %5, %6 : vector<8x512xf32>
    %cst_6 = arith.constant 0.00999999977 : f32
    %8 = vector.broadcast %cst_6 : f32 to vector<8x512xf32>
    %9 = arith.mulf %8, %5 : vector<8x512xf32>
    %10 = arith.select %7, %5, %9 : vector<8x512xi1>, vector<8x512xf32>
    %c0_7 = arith.constant 0 : index
    %c0_8 = arith.constant 0 : index
    %11 = vector.load %arg4[%c0_7, %c0_8] : memref<512x384xf32, #tpu.memory_space<vmem>>, vector<512x384xf32>
    %cst_9 = arith.constant dense<0.000000e+00> : vector<8x384xf32>
    %12 = tpu.matmul %10, %11, %cst_9 {dimension_numbers = #tpu.dot_dimension_numbers<[1], [0], [0], [1], [0, 0, 1, 1], [], []>} : vector<8x512xf32>, vector<512x384xf32>, vector<8x384xf32> -> vector<8x384xf32>
    %c0_10 = arith.constant 0 : index
    %c0_11 = arith.constant 0 : index
    %13 = vector.load %arg5[%c0_10, %c0_11] : memref<1x384xf32, #tpu.memory_space<vmem>>, vector<1x384xf32>
    %14 = vector.broadcast %13 : vector<1x384xf32> to vector<8x384xf32>
    %15 = arith.addf %12, %14 : vector<8x384xf32>
    %cst_12 = arith.constant 0.000000e+00 : f32
    %16 = vector.broadcast %cst_12 : f32 to vector<8x384xf32>
    %17 = arith.cmpf oge, %15, %16 : vector<8x384xf32>
    %cst_13 = arith.constant 0.00999999977 : f32
    %18 = vector.broadcast %cst_13 : f32 to vector<8x384xf32>
    %19 = arith.mulf %18, %15 : vector<8x384xf32>
    %20 = arith.select %17, %15, %19 : vector<8x384xi1>, vector<8x384xf32>
    %c0_14 = arith.constant 0 : index
    %c0_15 = arith.constant 0 : index
    %21 = vector.load %arg6[%c0_14, %c0_15] : memref<384x256xf32, #tpu.memory_space<vmem>>, vector<384x256xf32>
    %cst_16 = arith.constant dense<0.000000e+00> : vector<8x256xf32>
    %22 = tpu.matmul %20, %21, %cst_16 {dimension_numbers = #tpu.dot_dimension_numbers<[1], [0], [0], [1], [0, 0, 1, 1], [], []>} : vector<8x384xf32>, vector<384x256xf32>, vector<8x256xf32> -> vector<8x256xf32>
    %c0_17 = arith.constant 0 : index
    %c0_18 = arith.constant 0 : index
    %23 = vector.load %arg7[%c0_17, %c0_18] : memref<1x256xf32, #tpu.memory_space<vmem>>, vector<1x256xf32>
    %24 = vector.broadcast %23 : vector<1x256xf32> to vector<8x256xf32>
    %25 = arith.addf %22, %24 : vector<8x256xf32>
    %cst_19 = arith.constant 0.000000e+00 : f32
    %26 = vector.broadcast %cst_19 : f32 to vector<8x256xf32>
    %27 = arith.cmpf oge, %25, %26 : vector<8x256xf32>
    %cst_20 = arith.constant 0.00999999977 : f32
    %28 = vector.broadcast %cst_20 : f32 to vector<8x256xf32>
    %29 = arith.mulf %28, %25 : vector<8x256xf32>
    %30 = arith.select %27, %25, %29 : vector<8x256xi1>, vector<8x256xf32>
    %c0_21 = arith.constant 0 : index
    %c0_22 = arith.constant 0 : index
    %31 = vector.load %arg8[%c0_21, %c0_22] : memref<256x128xf32, #tpu.memory_space<vmem>>, vector<256x128xf32>
    %cst_23 = arith.constant dense<0.000000e+00> : vector<8x128xf32>
    %32 = tpu.matmul %30, %31, %cst_23 {dimension_numbers = #tpu.dot_dimension_numbers<[1], [0], [0], [1], [0, 0, 1, 1], [], []>} : vector<8x256xf32>, vector<256x128xf32>, vector<8x128xf32> -> vector<8x128xf32>
    %c0_24 = arith.constant 0 : index
    %c0_25 = arith.constant 0 : index
    %33 = vector.load %arg9[%c0_24, %c0_25] : memref<1x128xf32, #tpu.memory_space<vmem>>, vector<1x128xf32>
    %34 = vector.broadcast %33 : vector<1x128xf32> to vector<8x128xf32>
    %35 = arith.addf %32, %34 : vector<8x128xf32>
    %cst_26 = arith.constant -1.000000e+01 : f32
    %cst_27 = arith.constant 1.000000e+01 : f32
    %36 = vector.broadcast %cst_26 : f32 to vector<8x128xf32>
    %37 = arith.maximumf %36, %35 : vector<8x128xf32>
    %38 = vector.broadcast %cst_27 : f32 to vector<8x128xf32>
    %39 = arith.minimumf %38, %37 : vector<8x128xf32>
    %c0_28 = arith.constant 0 : index
    %c0_29 = arith.constant 0 : index
    %40 = vector.load %arg10[%c0_28, %c0_29] : memref<8x128xf32, #tpu.memory_space<vmem>>, vector<8x128xf32>
    tpu.vector_store %arg10[%c0_28, %c0_29], %39 {strides = array<i32>} : memref<8x128xf32, #tpu.memory_space<vmem>>, vector<8x128xf32>,
    return
  }
  func.func @transform_0(%arg0: i32) -> (i32, i32) {
    %c0_i32 = arith.constant 0 : i32
    %c0_i32_0 = arith.constant 0 : i32
    return %arg0, %c0_i32 : i32, i32
  }
  func.func @transform_1(%arg0: i32) -> (i32, i32) {
    %c0_i32 = arith.constant 0 : i32
    %c0_i32_0 = arith.constant 0 : i32
    %c0_i32_1 = arith.constant 0 : i32
    return %c0_i32, %c0_i32_0 : i32, i32
  }
  func.func @transform_2(%arg0: i32) -> (i32, i32) {
    %c0_i32 = arith.constant 0 : i32
    %c0_i32_0 = arith.constant 0 : i32
    %c0_i32_1 = arith.constant 0 : i32
    return %c0_i32, %c0_i32_0 : i32, i32
  }
  func.func @transform_3(%arg0: i32) -> (i32, i32) {
    %c0_i32 = arith.constant 0 : i32
    %c0_i32_0 = arith.constant 0 : i32
    %c0_i32_1 = arith.constant 0 : i32
    return %c0_i32, %c0_i32_0 : i32, i32
  }
  func.func @transform_4(%arg0: i32) -> (i32, i32) {
    %c0_i32 = arith.constant 0 : i32
    %c0_i32_0 = arith.constant 0 : i32
    %c0_i32_1 = arith.constant 0 : i32
    return %c0_i32, %c0_i32_0 : i32, i32
  }
  func.func @transform_5(%arg0: i32) -> (i32, i32) {
    %c0_i32 = arith.constant 0 : i32
    %c0_i32_0 = arith.constant 0 : i32
    %c0_i32_1 = arith.constant 0 : i32
    return %c0_i32, %c0_i32_0 : i32, i32
  }
  func.func @transform_6(%arg0: i32) -> (i32, i32) {
    %c0_i32 = arith.constant 0 : i32
    %c0_i32_0 = arith.constant 0 : i32
    %c0_i32_1 = arith.constant 0 : i32
    return %c0_i32, %c0_i32_0 : i32, i32
  }
  func.func @transform_7(%arg0: i32) -> (i32, i32) {
    %c0_i32 = arith.constant 0 : i32
    %c0_i32_0 = arith.constant 0 : i32
    %c0_i32_1 = arith.constant 0 : i32
    return %c0_i32, %c0_i32_0 : i32, i32
  }
  func.func @transform_8(%arg0: i32) -> (i32, i32) {
    %c0_i32 = arith.constant 0 : i32
    %c0_i32_0 = arith.constant 0 : i32
    %c0_i32_1 = arith.constant 0 : i32
    return %c0_i32, %c0_i32_0 : i32, i32
  }
  func.func @transform_9(%arg0: i32) -> (i32, i32) {
    %c0_i32 = arith.constant 0 : i32
    %c0_i32_0 = arith.constant 0 : i32
    return %arg0, %c0_i32 : i32, i32
  }
}

</mosaic_0001>

<llo_original>
// kernel: tpu_custom_call.1
$region0: #{tpu_custom_call.1}
  #allocation0 [shape = 'u32[]', space=smem, size = 0x4, offset = 0x4, fixed_abs, tag = 'smem constant byte address 0x4 - core index']
  #allocation1 [shape = 'u32[144,128]{1,0:T(1,128)}', space=vmem, size = 0x12000, scoped, tag = 'internal scratch']
  %s0 = inlined_call_operand.hbm [shape: f32[2,560], index: 0, kind: input, shape index: {}]
  %s1 = inlined_call_operand.hbm [shape: f32[560,512], index: 1, kind: input, shape index: {}]
  %s2 = inlined_call_operand.hbm [shape: f32[1,512], index: 2, kind: input, shape index: {}]
  %s3 = inlined_call_operand.hbm [shape: f32[512,384], index: 3, kind: input, shape index: {}]
  %s4 = inlined_call_operand.hbm [shape: f32[1,384], index: 4, kind: input, shape index: {}]
  %s5 = inlined_call_operand.hbm [shape: f32[384,256], index: 5, kind: input, shape index: {}]
  %s6 = inlined_call_operand.hbm [shape: f32[1,256], index: 6, kind: input, shape index: {}]
  %s7 = inlined_call_operand.hbm [shape: f32[256,128], index: 7, kind: input, shape index: {}]
  %s8 = inlined_call_operand.hbm [shape: f32[1,128], index: 8, kind: input, shape index: {}]
  %s9 = inlined_call_operand.hbm [shape: f32[2,128], index: 9, kind: output, shape index: {}]
  %s10 = sld [smem:[#allocation0]]
  $region82: #{tpu_custom_call.1} parent=0
    _
  %s12 = ssub.s32 1, %s10
  %s13 = scalar_select 0, %s12, %s10
  $region1: #{tpu_custom_call.1} parent=0
    #allocation2 [shape = 'u8[20480]{0}', space=vmem, size = 0x5000, scoped, tag = 'input window, operand 0, single buffered']
    #allocation3 [shape = 's32[1]{0}', space=sflag, size = 0x4, scoped, tag = 'scoped memory for tpu_custom_call.1']
    #allocation4 [shape = 's32[1]{0}', space=sflag, size = 0x4, scoped, tag = 'scoped memory for tpu_custom_call.1']
    #allocation5 [shape = 'u8[1146880]{0}', space=vmem, size = 0x118000, scoped, tag = 'input window, operand 1, single buffered']
    #allocation6 [shape = 's32[1]{0}', space=sflag, size = 0x4, scoped, tag = 'scoped memory for tpu_custom_call.1']
    #allocation7 [shape = 'u8[2048]{0}', space=vmem, size = 0x800, scoped, tag = 'input window, operand 2, single buffered']
    #allocation8 [shape = 'u8[786432]{0}', space=vmem, size = 0xc0000, scoped, tag = 'input window, operand 3, single buffered']
    #allocation9 [shape = 's32[1]{0}', space=sflag, size = 0x4, scoped, tag = 'scoped memory for tpu_custom_call.1']
    #allocation10 [shape = 'u8[1536]{0}', space=vmem, size = 0x800, scoped, tag = 'input window, operand 4, single buffered']
    #allocation11 [shape = 'u8[393216]{0}', space=vmem, size = 0x60000, scoped, tag = 'input window, operand 5, single buffered']
    #allocation12 [shape = 's32[1]{0}', space=sflag, size = 0x4, scoped, tag = 'scoped memory for tpu_custom_call.1']
    #allocation13 [shape = 'u8[1024]{0}', space=vmem, size = 0x400, scoped, tag = 'input window, operand 6, single buffered']
    #allocation14 [shape = 'u8[131072]{0}', space=vmem, size = 0x20000, scoped, tag = 'input window, operand 7, single buffered']
    #allocation15 [shape = 's32[1]{0}', space=sflag, size = 0x4, scoped, tag = 'scoped memory for tpu_custom_call.1']
    #allocation16 [shape = 'u8[512]{0}', space=vmem, size = 0x400, scoped, tag = 'input window, operand 8, single buffered']
    #allocation17 [shape = 'u8[4096]{0}', space=vmem, size = 0x1000, scoped, tag = 'output window, operand 0, single buffered']
    %14 = vsyncpa [#allocation3], 0
    %15 = vsyncpa [#allocation6], 0
    %16 = vsyncpa [#allocation9], 0
    %17 = vsyncpa [#allocation12], 0
    %18 = vsyncpa [#allocation15], 0
    %19 = vsyncpa [#allocation4], 0
    // Predicated region
    $region2: #{tpu_custom_call.1} parent=1 // pred_check
      _
    $region3: #{tpu_custom_call.1} parent=1 // pred_check_branch
      %21 = sbr.rel (0) target = $region5
    $region4: #{tpu_custom_call.1} parent=1 // pred_region
      %s23 = ssub.s32 640, 160
      %24 = vsyncadd [#allocation3], %s23
      %s25 = sshll.u32 [#allocation2], 4
      %s26 = int_to_ptr.vmem [resolvable:$true] %s25
      %31 = dma.hbm_to_vmem [thread:$0]  %s0, 160, %s26, [#allocation3], 160, 160, 10
    $region5: #{tpu_custom_call.1} parent=1 // pred_fallthru
      _
    // Predicated region
    $region6: #{tpu_custom_call.1} parent=1 // pred_check
      _
    $region7: #{tpu_custom_call.1} parent=1 // pred_check_branch
      %33 = sbr.rel (0) target = $region9
    $region8: #{tpu_custom_call.1} parent=1 // pred_region
      %s35 = ssub.s32 35840, 35840
      %36 = vsyncadd [#allocation6], %s35
      %s37 = sshll.u32 [#allocation5], 4
      %s38 = int_to_ptr.vmem [resolvable:$true] %s37
      %43 = dma.hbm_to_vmem [thread:$0]  %s1, 35840, %s38, [#allocation6], 512, 512, 32
    $region9: #{tpu_custom_call.1} parent=1 // pred_fallthru
      _
    // Predicated region
    $region10: #{tpu_custom_call.1} parent=1 // pred_check
      _
    $region11: #{tpu_custom_call.1} parent=1 // pred_check_branch
      %45 = sbr.rel (0) target = $region13
    $region12: #{tpu_custom_call.1} parent=1 // pred_region
      %s47 = ssub.s32 64, 64
      %48 = vsyncadd [#allocation6], %s47
      %s50 = sshll.u32 [#allocation7], 4
      %s51 = int_to_ptr.vmem [resolvable:$true] %s50
      %53 = dma.hbm_to_vmem [thread:$0]  %s2, 64, %s51, [#allocation6]
    $region13: #{tpu_custom_call.1} parent=1 // pred_fallthru
      _
    // Predicated region
    $region14: #{tpu_custom_call.1} parent=1 // pred_check
      _
    $region15: #{tpu_custom_call.1} parent=1 // pred_check_branch
      %55 = sbr.rel (0) target = $region17
    $region16: #{tpu_custom_call.1} parent=1 // pred_region
      %s57 = ssub.s32 24576, 24576
      %58 = vsyncadd [#allocation9], %s57
      %s59 = sshll.u32 [#allocation8], 4
      %s60 = int_to_ptr.vmem [resolvable:$true] %s59
      %65 = dma.hbm_to_vmem [thread:$0]  %s3, 24576, %s60, [#allocation9], 384, 384, 24
    $region17: #{tpu_custom_call.1} parent=1 // pred_fallthru
      _
    // Predicated region
    $region18: #{tpu_custom_call.1} parent=1 // pred_check
      _
    $region19: #{tpu_custom_call.1} parent=1 // pred_check_branch
      %67 = sbr.rel (0) target = $region21
    $region20: #{tpu_custom_call.1} parent=1 // pred_region
      %s69 = ssub.s32 48, 48
      %70 = vsyncadd [#allocation9], %s69
      %s72 = sshll.u32 [#allocation10], 4
      %s73 = int_to_ptr.vmem [resolvable:$true] %s72
      %75 = dma.hbm_to_vmem [thread:$0]  %s4, 48, %s73, [#allocation9]
    $region21: #{tpu_custom_call.1} parent=1 // pred_fallthru
      _
    // Predicated region
    $region22: #{tpu_custom_call.1} parent=1 // pred_check
      _
    $region23: #{tpu_custom_call.1} parent=1 // pred_check_branch
      %77 = sbr.rel (0) target = $region25
    $region24: #{tpu_custom_call.1} parent=1 // pred_region
      %s79 = ssub.s32 12288, 12288
      %80 = vsyncadd [#allocation12], %s79
      %s81 = sshll.u32 [#allocation11], 4
      %s82 = int_to_ptr.vmem [resolvable:$true] %s81
      %87 = dma.hbm_to_vmem [thread:$0]  %s5, 12288, %s82, [#allocation12], 256, 256, 16
    $region25: #{tpu_custom_call.1} parent=1 // pred_fallthru
      _
    // Predicated region
    $region26: #{tpu_custom_call.1} parent=1 // pred_check
      _
    $region27: #{tpu_custom_call.1} parent=1 // pred_check_branch
      %89 = sbr.rel (0) target = $region29
    $region28: #{tpu_custom_call.1} parent=1 // pred_region
      %s91 = ssub.s32 32, 32
      %92 = vsyncadd [#allocation12], %s91
      %s94 = sshll.u32 [#allocation13], 4
      %s95 = int_to_ptr.vmem [resolvable:$true] %s94
      %97 = dma.hbm_to_vmem [thread:$0]  %s6, 32, %s95, [#allocation12]
    $region29: #{tpu_custom_call.1} parent=1 // pred_fallthru
      _
    // Predicated region
    $region30: #{tpu_custom_call.1} parent=1 // pred_check
      _
    $region31: #{tpu_custom_call.1} parent=1 // pred_check_branch
      %99 = sbr.rel (0) target = $region33
    $region32: #{tpu_custom_call.1} parent=1 // pred_region
      %s101 = ssub.s32 4096, 4096
      %102 = vsyncadd [#allocation15], %s101
      %s103 = sshll.u32 [#allocation14], 4
      %s104 = int_to_ptr.vmem [resolvable:$true] %s103
      %109 = dma.hbm_to_vmem [thread:$0]  %s7, 4096, %s104, [#allocation15], 128, 128, 8
    $region33: #{tpu_custom_call.1} parent=1 // pred_fallthru
      _
    // Predicated region
    $region34: #{tpu_custom_call.1} parent=1 // pred_check
      _
    $region35: #{tpu_custom_call.1} parent=1 // pred_check_branch
      %111 = sbr.rel (0) target = $region37
    $region36: #{tpu_custom_call.1} parent=1 // pred_region
      %s113 = ssub.s32 16, 16
      %114 = vsyncadd [#allocation15], %s113
      %s116 = sshll.u32 [#allocation16], 4
      %s117 = int_to_ptr.vmem [resolvable:$true] %s116
      %119 = dma.hbm_to_vmem [thread:$0]  %s8, 16, %s117, [#allocation15]
    $region37: #{tpu_custom_call.1} parent=1 // pred_fallthru
      _
    // Predicated region
    $region38: #{tpu_custom_call.1} parent=1 // pred_check
      _
    $region39: #{tpu_custom_call.1} parent=1 // pred_check_branch
      %121 = sbr.rel (0) target = $region41
    $region40: #{tpu_custom_call.1} parent=1 // pred_region
      %122 = dma.done [#allocation3], 640
    $region41: #{tpu_custom_call.1} parent=1 // pred_fallthru
      _
    // Predicated region
    $region42: #{tpu_custom_call.1} parent=1 // pred_check
      _
    $region43: #{tpu_custom_call.1} parent=1 // pred_check_branch
      %124 = sbr.rel (0) target = $region45
    $region44: #{tpu_custom_call.1} parent=1 // pred_region
      %125 = dma.done [#allocation6], 35840
    $region45: #{tpu_custom_call.1} parent=1 // pred_fallthru
      _
    // Predicated region
    $region46: #{tpu_custom_call.1} parent=1 // pred_check
      _
    $region47: #{tpu_custom_call.1} parent=1 // pred_check_branch
      %127 = sbr.rel (0) target = $region49
    $region48: #{tpu_custom_call.1} parent=1 // pred_region
      %128 = dma.done [#allocation6], 64
    $region49: #{tpu_custom_call.1} parent=1 // pred_fallthru
      _
    // Predicated region
    $region50: #{tpu_custom_call.1} parent=1 // pred_check
      _
    $region51: #{tpu_custom_call.1} parent=1 // pred_check_branch
      %130 = sbr.rel (0) target = $region53
    $region52: #{tpu_custom_call.1} parent=1 // pred_region
      %131 = dma.done [#allocation9], 24576
    $region53: #{tpu_custom_call.1} parent=1 // pred_fallthru
      _
    // Predicated region
    $region54: #{tpu_custom_call.1} parent=1 // pred_check
      _
    $region55: #{tpu_custom_call.1} parent=1 // pred_check_branch
      %133 = sbr.rel (0) target = $region57
    $region56: #{tpu_custom_call.1} parent=1 // pred_region
      %134 = dma.done [#allocation9], 48
    $region57: #{tpu_custom_call.1} parent=1 // pred_fallthru
      _
    // Predicated region
    $region58: #{tpu_custom_call.1} parent=1 // pred_check
      _
    $region59: #{tpu_custom_call.1} parent=1 // pred_check_branch
      %136 = sbr.rel (0) target = $region61
    $region60: #{tpu_custom_call.1} parent=1 // pred_region
      %137 = dma.done [#allocation12], 12288
    $region61: #{tpu_custom_call.1} parent=1 // pred_fallthru
      _
    // Predicated region
    $region62: #{tpu_custom_call.1} parent=1 // pred_check
      _
    $region63: #{tpu_custom_call.1} parent=1 // pred_check_branch
      %139 = sbr.rel (0) target = $region65
    $region64: #{tpu_custom_call.1} parent=1 // pred_region
      %140 = dma.done [#allocation12], 32
    $region65: #{tpu_custom_call.1} parent=1 // pred_fallthru
      _
    // Predicated region
    $region66: #{tpu_custom_call.1} parent=1 // pred_check
      _
    $region67: #{tpu_custom_call.1} parent=1 // pred_check_branch
      %142 = sbr.rel (0) target = $region69
    $region68: #{tpu_custom_call.1} parent=1 // pred_region
      %143 = dma.done [#allocation15], 4096
    $region69: #{tpu_custom_call.1} parent=1 // pred_fallthru
      _
    // Predicated region
    $region70: #{tpu_custom_call.1} parent=1 // pred_check
      _
    $region71: #{tpu_custom_call.1} parent=1 // pred_check_branch
      %145 = sbr.rel (0) target = $region73
    $region72: #{tpu_custom_call.1} parent=1 // pred_region
      %146 = dma.done [#allocation15], 16
    $region73: #{tpu_custom_call.1} parent=1 // pred_fallthru
      _
    %v147 = vld [vmem:[#allocation2] sm:$0xff]
    %v148 = vld [vmem:[#allocation2 + $0x8] sm:$0x3]
    %v149 = vld [vmem:[#allocation2 + $0xa] sm:$0xff]
    %v150 = vld [vmem:[#allocation2 + $0x12] sm:$0x3]
    %v151 = vld [vmem:[#allocation2 + $0x14] sm:$0xff]
    %v152 = vld [vmem:[#allocation2 + $0x1c] sm:$0x3]
    %v153 = vld [vmem:[#allocation2 + $0x1e] sm:$0xff]
    %v154 = vld [vmem:[#allocation2 + $0x26] sm:$0x3]
    %v155 = vld [vmem:[#allocation5] sm:$0xff]
    %v156 = vld [vmem:[#allocation5 + $0x8] sm:$0xff]
    %v157 = vld [vmem:[#allocation5 + $0x10] sm:$0xff]
    %v158 = vld [vmem:[#allocation5 + $0x18] sm:$0xff]
    %v159 = vld [vmem:[#allocation5 + $0x20] sm:$0xff]
    %v160 = vld [vmem:[#allocation5 + $0x28] sm:$0xff]
    %v161 = vld [vmem:[#allocation5 + $0x30] sm:$0xff]
    %v162 = vld [vmem:[#allocation5 + $0x38] sm:$0xff]
    %v163 = vld [vmem:[#allocation5 + $0x40] sm:$0xff]
    %v164 = vld [vmem:[#allocation5 + $0x48] sm:$0xff]
    %v165 = vld [vmem:[#allocation5 + $0x50] sm:$0xff]
    %v166 = vld [vmem:[#allocation5 + $0x58] sm:$0xff]
    %v167 = vld [vmem:[#allocation5 + $0x60] sm:$0xff]
    %v168 = vld [vmem:[#allocation5 + $0x68] sm:$0xff]
    %v169 = vld [vmem:[#allocation5 + $0x70] sm:$0xff]
    %v170 = vld [vmem:[#allocation5 + $0x78] sm:$0xff]
    %v171 = vld [vmem:[#allocation5 + $0x80] sm:$0xff]
    %v172 = vld [vmem:[#allocation5 + $0x88] sm:$0xff]
    %v173 = vld [vmem:[#allocation5 + $0x90] sm:$0xff]
    %v174 = vld [vmem:[#allocation5 + $0x98] sm:$0xff]
    %v175 = vld [vmem:[#allocation5 + $0xa0] sm:$0xff]
    %v176 = vld [vmem:[#allocation5 + $0xa8] sm:$0xff]
    %v177 = vld [vmem:[#allocation5 + $0xb0] sm:$0xff]
    %v178 = vld [vmem:[#allocation5 + $0xb8] sm:$0xff]
    %v179 = vld [vmem:[#allocation5 + $0xc0] sm:$0xff]
    %v180 = vld [vmem:[#allocation5 + $0xc8] sm:$0xff]
    %v181 = vld [vmem:[#allocation5 + $0xd0] sm:$0xff]
    %v182 = vld [vmem:[#allocation5 + $0xd8] sm:$0xff]
    %v183 = vld [vmem:[#allocation5 + $0xe0] sm:$0xff]
    %v184 = vld [vmem:[#allocation5 + $0xe8] sm:$0xff]
    %v185 = vld [vmem:[#allocation5 + $0xf0] sm:$0xff]
    %v186 = vld [vmem:[#allocation5 + $0xf8] sm:$0xff]
    %v187 = vld [vmem:[#allocation5 + $0x100] sm:$0xff]
    %v188 = vld [vmem:[#allocation5 + $0x108] sm:$0xff]
    %v189 = vld [vmem:[#allocation5 + $0x110] sm:$0xff]
    %v190 = vld [vmem:[#allocation5 + $0x118] sm:$0xff]
    %v191 = vld [vmem:[#allocation5 + $0x120] sm:$0xff]
    %v192 = vld [vmem:[#allocation5 + $0x128] sm:$0xff]
    %v193 = vld [vmem:[#allocation5 + $0x130] sm:$0xff]
    %v194 = vld [vmem:[#allocation5 + $0x138] sm:$0xff]
    %v195 = vld [vmem:[#allocation5 + $0x140] sm:$0xff]
    %v196 = vld [vmem:[#allocation5 + $0x148] sm:$0xff]
    %v197 = vld [vmem:[#allocation5 + $0x150] sm:$0xff]
    %v198 = vld [vmem:[#allocation5 + $0x158] sm:$0xff]
    %v199 = vld [vmem:[#allocation5 + $0x160] sm:$0xff]
    %v200 = vld [vmem:[#allocation5 + $0x168] sm:$0xff]
    %v201 = vld [vmem:[#allocation5 + $0x170] sm:$0xff]
    %v202 = vld [vmem:[#allocation5 + $0x178] sm:$0xff]
    %v203 = vld [vmem:[#allocation5 + $0x180] sm:$0xff]
    %v204 = vld [vmem:[#allocation5 + $0x188] sm:$0xff]
    %v205 = vld [vmem:[#allocation5 + $0x190] sm:$0xff]
    %v206 = vld [vmem:[#allocation5 + $0x198] sm:$0xff]
    %v207 = vld [vmem:[#allocation5 + $0x1a0] sm:$0xff]
    %v208 = vld [vmem:[#allocation5 + $0x1a8] sm:$0xff]
    %v209 = vld [vmem:[#allocation5 + $0x1b0] sm:$0xff]
    %v210 = vld [vmem:[#allocation5 + $0x1b8] sm:$0xff]
    %v211 = vld [vmem:[#allocation5 + $0x1c0] sm:$0xff]
    %v212 = vld [vmem:[#allocation5 + $0x1c8] sm:$0xff]
    %v213 = vld [vmem:[#allocation5 + $0x1d0] sm:$0xff]
    %v214 = vld [vmem:[#allocation5 + $0x1d8] sm:$0xff]
    %v215 = vld [vmem:[#allocation5 + $0x1e0] sm:$0xff]
    %v216 = vld [vmem:[#allocation5 + $0x1e8] sm:$0xff]
    %v217 = vld [vmem:[#allocation5 + $0x1f0] sm:$0xff]
    %v218 = vld [vmem:[#allocation5 + $0x1f8] sm:$0xff]
    %v219 = vld [vmem:[#allocation5 + $0x200] sm:$0xff]
    %v220 = vld [vmem:[#allocation5 + $0x208] sm:$0xff]
    %v221 = vld [vmem:[#allocation5 + $0x210] sm:$0xff]
    %v222 = vld [vmem:[#allocation5 + $0x218] sm:$0xff]
    %v223 = vld [vmem:[#allocation5 + $0x220] sm:$0xff]
    %v224 = vld [vmem:[#allocation5 + $0x228] sm:$0xff]
    %v225 = vld [vmem:[#allocation5 + $0x230] sm:$0xff]
    %v226 = vld [vmem:[#allocation5 + $0x238] sm:$0xff]
    %v227 = vld [vmem:[#allocation5 + $0x240] sm:$0xff]
    %v228 = vld [vmem:[#allocation5 + $0x248] sm:$0xff]
    %v229 = vld [vmem:[#allocation5 + $0x250] sm:$0xff]
    %v230 = vld [vmem:[#allocation5 + $0x258] sm:$0xff]
    %v231 = vld [vmem:[#allocation5 + $0x260] sm:$0xff]
    %v232 = vld [vmem:[#allocation5 + $0x268] sm:$0xff]
    %v233 = vld [vmem:[#allocation5 + $0x270] sm:$0xff]
    %v234 = vld [vmem:[#allocation5 + $0x278] sm:$0xff]
    %v235 = vld [vmem:[#allocation5 + $0x280] sm:$0xff]
    %v236 = vld [vmem:[#allocation5 + $0x288] sm:$0xff]
    %v237 = vld [vmem:[#allocation5 + $0x290] sm:$0xff]
    %v238 = vld [vmem:[#allocation5 + $0x298] sm:$0xff]
    %v239 = vld [vmem:[#allocation5 + $0x2a0] sm:$0xff]
    %v240 = vld [vmem:[#allocation5 + $0x2a8] sm:$0xff]
    %v241 = vld [vmem:[#allocation5 + $0x2b0] sm:$0xff]
    %v242 = vld [vmem:[#allocation5 + $0x2b8] sm:$0xff]
    %v243 = vld [vmem:[#allocation5 + $0x2c0] sm:$0xff]
    %v244 = vld [vmem:[#allocation5 + $0x2c8] sm:$0xff]
    %v245 = vld [vmem:[#allocation5 + $0x2d0] sm:$0xff]
    %v246 = vld [vmem:[#allocation5 + $0x2d8] sm:$0xff]
    %v247 = vld [vmem:[#allocation5 + $0x2e0] sm:$0xff]
    %v248 = vld [vmem:[#allocation5 + $0x2e8] sm:$0xff]
    %v249 = vld [vmem:[#allocation5 + $0x2f0] sm:$0xff]
    %v250 = vld [vmem:[#allocation5 + $0x2f8] sm:$0xff]
    %v251 = vld [vmem:[#allocation5 + $0x300] sm:$0xff]
    %v252 = vld [vmem:[#allocation5 + $0x308] sm:$0xff]
    %v253 = vld [vmem:[#allocation5 + $0x310] sm:$0xff]
    %v254 = vld [vmem:[#allocation5 + $0x318] sm:$0xff]
    %v255 = vld [vmem:[#allocation5 + $0x320] sm:$0xff]
    %v256 = vld [vmem:[#allocation5 + $0x328] sm:$0xff]
    %v257 = vld [vmem:[#allocation5 + $0x330] sm:$0xff]
    %v258 = vld [vmem:[#allocation5 + $0x338] sm:$0xff]
    %v259 = vld [vmem:[#allocation5 + $0x340] sm:$0xff]
    %v260 = vld [vmem:[#allocation5 + $0x348] sm:$0xff]
    %v261 = vld [vmem:[#allocation5 + $0x350] sm:$0xff]
    %v262 = vld [vmem:[#allocation5 + $0x358] sm:$0xff]
    %v263 = vld [vmem:[#allocation5 + $0x360] sm:$0xff]
    %v264 = vld [vmem:[#allocation5 + $0x368] sm:$0xff]
    %v265 = vld [vmem:[#allocation5 + $0x370] sm:$0xff]
    %v266 = vld [vmem:[#allocation5 + $0x378] sm:$0xff]
    %v267 = vld [vmem:[#allocation5 + $0x380] sm:$0xff]
    %v268 = vld [vmem:[#allocation5 + $0x388] sm:$0xff]
    %v269 = vld [vmem:[#allocation5 + $0x390] sm:$0xff]
    %v270 = vld [vmem:[#allocation5 + $0x398] sm:$0xff]
    %v271 = vld [vmem:[#allocation5 + $0x3a0] sm:$0xff]
    %v272 = vld [vmem:[#allocation5 + $0x3a8] sm:$0xff]
    %v273 = vld [vmem:[#allocation5 + $0x3b0] sm:$0xff]
    %v274 = vld [vmem:[#allocation5 + $0x3b8] sm:$0xff]
    %v275 = vld [vmem:[#allocation5 + $0x3c0] sm:$0xff]
    %v276 = vld [vmem:[#allocation5 + $0x3c8] sm:$0xff]
    %v277 = vld [vmem:[#allocation5 + $0x3d0] sm:$0xff]
    %v278 = vld [vmem:[#allocation5 + $0x3d8] sm:$0xff]
    %v279 = vld [vmem:[#allocation5 + $0x3e0] sm:$0xff]
    %v280 = vld [vmem:[#allocation5 + $0x3e8] sm:$0xff]
    %v281 = vld [vmem:[#allocation5 + $0x3f0] sm:$0xff]
    %v282 = vld [vmem:[#allocation5 + $0x3f8] sm:$0xff]
    %v283 = vld [vmem:[#allocation5 + $0x400] sm:$0xff]
    %v284 = vld [vmem:[#allocation5 + $0x408] sm:$0xff]
    %v285 = vld [vmem:[#allocation5 + $0x410] sm:$0xff]
    %v286 = vld [vmem:[#allocation5 + $0x418] sm:$0xff]
    %v287 = vld [vmem:[#allocation5 + $0x420] sm:$0xff]
    %v288 = vld [vmem:[#allocation5 + $0x428] sm:$0xff]
    %v289 = vld [vmem:[#allocation5 + $0x430] sm:$0xff]
    %v290 = vld [vmem:[#allocation5 + $0x438] sm:$0xff]
    %v291 = vld [vmem:[#allocation5 + $0x440] sm:$0xff]
    %v292 = vld [vmem:[#allocation5 + $0x448] sm:$0xff]
    %v293 = vld [vmem:[#allocation5 + $0x450] sm:$0xff]
    %v294 = vld [vmem:[#allocation5 + $0x458] sm:$0xff]
    %v295 = vld [vmem:[#allocation5 + $0x460] sm:$0xff]
    %v296 = vld [vmem:[#allocation5 + $0x468] sm:$0xff]
    %v297 = vld [vmem:[#allocation5 + $0x470] sm:$0xff]
    %v298 = vld [vmem:[#allocation5 + $0x478] sm:$0xff]
    %v299 = vld [vmem:[#allocation5 + $0x480] sm:$0xff]
    %v300 = vld [vmem:[#allocation5 + $0x488] sm:$0xff]
    %v301 = vld [vmem:[#allocation5 + $0x490] sm:$0xff]
    %v302 = vld [vmem:[#allocation5 + $0x498] sm:$0xff]
    %v303 = vld [vmem:[#allocation5 + $0x4a0] sm:$0xff]
    %v304 = vld [vmem:[#allocation5 + $0x4a8] sm:$0xff]
    %v305 = vld [vmem:[#allocation5 + $0x4b0] sm:$0xff]
    %v306 = vld [vmem:[#allocation5 + $0x4b8] sm:$0xff]
    %v307 = vld [vmem:[#allocation5 + $0x4c0] sm:$0xff]
    %v308 = vld [vmem:[#allocation5 + $0x4c8] sm:$0xff]
    %v309 = vld [vmem:[#allocation5 + $0x4d0] sm:$0xff]
    %v310 = vld [vmem:[#allocation5 + $0x4d8] sm:$0xff]
    %v311 = vld [vmem:[#allocation5 + $0x4e0] sm:$0xff]
    %v312 = vld [vmem:[#allocation5 + $0x4e8] sm:$0xff]
    %v313 = vld [vmem:[#allocation5 + $0x4f0] sm:$0xff]
    %v314 = vld [vmem:[#allocation5 + $0x4f8] sm:$0xff]
    %v315 = vld [vmem:[#allocation5 + $0x500] sm:$0xff]
    %v316 = vld [vmem:[#allocation5 + $0x508] sm:$0xff]
    %v317 = vld [vmem:[#allocation5 + $0x510] sm:$0xff]
    %v318 = vld [vmem:[#allocation5 + $0x518] sm:$0xff]
    %v319 = vld [vmem:[#allocation5 + $0x520] sm:$0xff]
    %v320 = vld [vmem:[#allocation5 + $0x528] sm:$0xff]
    %v321 = vld [vmem:[#allocation5 + $0x530] sm:$0xff]
    %v322 = vld [vmem:[#allocation5 + $0x538] sm:$0xff]
    %v323 = vld [vmem:[#allocation5 + $0x540] sm:$0xff]
    %v324 = vld [vmem:[#allocation5 + $0x548] sm:$0xff]
    %v325 = vld [vmem:[#allocation5 + $0x550] sm:$0xff]
    %v326 = vld [vmem:[#allocation5 + $0x558] sm:$0xff]
    %v327 = vld [vmem:[#allocation5 + $0x560] sm:$0xff]
    %v328 = vld [vmem:[#allocation5 + $0x568] sm:$0xff]
    %v329 = vld [vmem:[#allocation5 + $0x570] sm:$0xff]
    %v330 = vld [vmem:[#allocation5 + $0x578] sm:$0xff]
    %v331 = vld [vmem:[#allocation5 + $0x580] sm:$0xff]
    %v332 = vld [vmem:[#allocation5 + $0x588] sm:$0xff]
    %v333 = vld [vmem:[#allocation5 + $0x590] sm:$0xff]
    %v334 = vld [vmem:[#allocation5 + $0x598] sm:$0xff]
    %v335 = vld [vmem:[#allocation5 + $0x5a0] sm:$0xff]
    %v336 = vld [vmem:[#allocation5 + $0x5a8] sm:$0xff]
    %v337 = vld [vmem:[#allocation5 + $0x5b0] sm:$0xff]
    %v338 = vld [vmem:[#allocation5 + $0x5b8] sm:$0xff]
    %v339 = vld [vmem:[#allocation5 + $0x5c0] sm:$0xff]
    %v340 = vld [vmem:[#allocation5 + $0x5c8] sm:$0xff]
    %v341 = vld [vmem:[#allocation5 + $0x5d0] sm:$0xff]
    %v342 = vld [vmem:[#allocation5 + $0x5d8] sm:$0xff]
    %v343 = vld [vmem:[#allocation5 + $0x5e0] sm:$0xff]
    %v344 = vld [vmem:[#allocation5 + $0x5e8] sm:$0xff]
    %v345 = vld [vmem:[#allocation5 + $0x5f0] sm:$0xff]
    %v346 = vld [vmem:[#allocation5 + $0x5f8] sm:$0xff]
    %v347 = vld [vmem:[#allocation5 + $0x600] sm:$0xff]
    %v348 = vld [vmem:[#allocation5 + $0x608] sm:$0xff]
    %v349 = vld [vmem:[#allocation5 + $0x610] sm:$0xff]
    %v350 = vld [vmem:[#allocation5 + $0x618] sm:$0xff]
    %v351 = vld [vmem:[#allocation5 + $0x620] sm:$0xff]
    %v352 = vld [vmem:[#allocation5 + $0x628] sm:$0xff]
    %v353 = vld [vmem:[#allocation5 + $0x630] sm:$0xff]
    %v354 = vld [vmem:[#allocation5 + $0x638] sm:$0xff]
    %v355 = vld [vmem:[#allocation5 + $0x640] sm:$0xff]
    %v356 = vld [vmem:[#allocation5 + $0x648] sm:$0xff]
    %v357 = vld [vmem:[#allocation5 + $0x650] sm:$0xff]
    %v358 = vld [vmem:[#allocation5 + $0x658] sm:$0xff]
    %v359 = vld [vmem:[#allocation5 + $0x660] sm:$0xff]
    %v360 = vld [vmem:[#allocation5 + $0x668] sm:$0xff]
    %v361 = vld [vmem:[#allocation5 + $0x670] sm:$0xff]
    %v362 = vld [vmem:[#allocation5 + $0x678] sm:$0xff]
    %v363 = vld [vmem:[#allocation5 + $0x680] sm:$0xff]
    %v364 = vld [vmem:[#allocation5 + $0x688] sm:$0xff]
    %v365 = vld [vmem:[#allocation5 + $0x690] sm:$0xff]
    %v366 = vld [vmem:[#allocation5 + $0x698] sm:$0xff]
    %v367 = vld [vmem:[#allocation5 + $0x6a0] sm:$0xff]
    %v368 = vld [vmem:[#allocation5 + $0x6a8] sm:$0xff]
    %v369 = vld [vmem:[#allocation5 + $0x6b0] sm:$0xff]
    %v370 = vld [vmem:[#allocation5 + $0x6b8] sm:$0xff]
    %v371 = vld [vmem:[#allocation5 + $0x6c0] sm:$0xff]
    %v372 = vld [vmem:[#allocation5 + $0x6c8] sm:$0xff]
    %v373 = vld [vmem:[#allocation5 + $0x6d0] sm:$0xff]
    %v374 = vld [vmem:[#allocation5 + $0x6d8] sm:$0xff]
    %v375 = vld [vmem:[#allocation5 + $0x6e0] sm:$0xff]
    %v376 = vld [vmem:[#allocation5 + $0x6e8] sm:$0xff]
    %v377 = vld [vmem:[#allocation5 + $0x6f0] sm:$0xff]
    %v378 = vld [vmem:[#allocation5 + $0x6f8] sm:$0xff]
    %v379 = vld [vmem:[#allocation5 + $0x700] sm:$0xff]
    %v380 = vld [vmem:[#allocation5 + $0x708] sm:$0xff]
    %v381 = vld [vmem:[#allocation5 + $0x710] sm:$0xff]
    %v382 = vld [vmem:[#allocation5 + $0x718] sm:$0xff]
    %v383 = vld [vmem:[#allocation5 + $0x720] sm:$0xff]
    %v384 = vld [vmem:[#allocation5 + $0x728] sm:$0xff]
    %v385 = vld [vmem:[#allocation5 + $0x730] sm:$0xff]
    %v386 = vld [vmem:[#allocation5 + $0x738] sm:$0xff]
    %v387 = vld [vmem:[#allocation5 + $0x740] sm:$0xff]
    %v388 = vld [vmem:[#allocation5 + $0x748] sm:$0xff]
    %v389 = vld [vmem:[#allocation5 + $0x750] sm:$0xff]
    %v390 = vld [vmem:[#allocation5 + $0x758] sm:$0xff]
    %v391 = vld [vmem:[#allocation5 + $0x760] sm:$0xff]
    %v392 = vld [vmem:[#allocation5 + $0x768] sm:$0xff]
    %v393 = vld [vmem:[#allocation5 + $0x770] sm:$0xff]
    %v394 = vld [vmem:[#allocation5 + $0x778] sm:$0xff]
    %v395 = vld [vmem:[#allocation5 + $0x780] sm:$0xff]
    %v396 = vld [vmem:[#allocation5 + $0x788] sm:$0xff]
    %v397 = vld [vmem:[#allocation5 + $0x790] sm:$0xff]
    %v398 = vld [vmem:[#allocation5 + $0x798] sm:$0xff]
    %v399 = vld [vmem:[#allocation5 + $0x7a0] sm:$0xff]
    %v400 = vld [vmem:[#allocation5 + $0x7a8] sm:$0xff]
    %v401 = vld [vmem:[#allocation5 + $0x7b0] sm:$0xff]
    %v402 = vld [vmem:[#allocation5 + $0x7b8] sm:$0xff]
    %v403 = vld [vmem:[#allocation5 + $0x7c0] sm:$0xff]
    %v404 = vld [vmem:[#allocation5 + $0x7c8] sm:$0xff]
    %v405 = vld [vmem:[#allocation5 + $0x7d0] sm:$0xff]
    %v406 = vld [vmem:[#allocation5 + $0x7d8] sm:$0xff]
    %v407 = vld [vmem:[#allocation5 + $0x7e0] sm:$0xff]
    %v408 = vld [vmem:[#allocation5 + $0x7e8] sm:$0xff]
    %v409 = vld [vmem:[#allocation5 + $0x7f0] sm:$0xff]
    %v410 = vld [vmem:[#allocation5 + $0x7f8] sm:$0xff]
    %v411 = vld [vmem:[#allocation5 + $0x800] sm:$0xff]
    %v412 = vld [vmem:[#allocation5 + $0x808] sm:$0xff]
    %v413 = vld [vmem:[#allocation5 + $0x810] sm:$0xff]
    %v414 = vld [vmem:[#allocation5 + $0x818] sm:$0xff]
    %v415 = vld [vmem:[#allocation5 + $0x820] sm:$0xff]
    %v416 = vld [vmem:[#allocation5 + $0x828] sm:$0xff]
    %v417 = vld [vmem:[#allocation5 + $0x830] sm:$0xff]
    %v418 = vld [vmem:[#allocation5 + $0x838] sm:$0xff]
    %v419 = vld [vmem:[#allocation5 + $0x840] sm:$0xff]
    %v420 = vld [vmem:[#allocation5 + $0x848] sm:$0xff]
    %v421 = vld [vmem:[#allocation5 + $0x850] sm:$0xff]
    %v422 = vld [vmem:[#allocation5 + $0x858] sm:$0xff]
    %v423 = vld [vmem:[#allocation5 + $0x860] sm:$0xff]
    %v424 = vld [vmem:[#allocation5 + $0x868] sm:$0xff]
    %v425 = vld [vmem:[#allocation5 + $0x870] sm:$0xff]
    %v426 = vld [vmem:[#allocation5 + $0x878] sm:$0xff]
    %v427 = vld [vmem:[#allocation5 + $0x880] sm:$0xff]
    %v428 = vld [vmem:[#allocation5 + $0x888] sm:$0xff]
    %v429 = vld [vmem:[#allocation5 + $0x890] sm:$0xff]
    %v430 = vld [vmem:[#allocation5 + $0x898] sm:$0xff]
    %v431 = vld [vmem:[#allocation5 + $0x8a0] sm:$0xff]
    %v432 = vld [vmem:[#allocation5 + $0x8a8] sm:$0xff]
    %v433 = vld [vmem:[#allocation5 + $0x8b0] sm:$0xff]
    %v434 = vld [vmem:[#allocation5 + $0x8b8] sm:$0xff]
    %v435 = vld [vmem:[#allocation7] sm:$0xf]
    %v437 = vlaneseq
    %v438 = vshrl.u32 %v437, 7
    %v439 = vsub.s32 0, %v438
    %v440 = vrot.slane %v435, %v439
    %v441 = vlaneseq
    %v442 = vshrl.u32 %v441, 7
    %v443 = vsub.s32 1, %v442
    %v444 = vrot.slane %v435, %v443
    %v445 = vlaneseq
    %v446 = vshrl.u32 %v445, 7
    %v447 = vsub.s32 2, %v446
    %v448 = vrot.slane %v435, %v447
    %v449 = vlaneseq
    %v450 = vshrl.u32 %v449, 7
    %v451 = vsub.s32 3, %v450
    %v452 = vrot.slane %v435, %v451
    %v465 = vcombine.low %v147, %v149
    %v466 = vcombine.high %v147, %v149
    %v467 = vcombine.low %v151, %v153
    %v468 = vcombine.high %v151, %v153
    %v470 = vunpack.c.l.s4 1983009808
    %v471 = vunpack.c.0.s8 %v470
    %v472 = vlaneseq
    %v473 = vshrl.u32 %v472, 7
    %v474 = vsub.s32 %v471, %v473
    %v475 = vrot.slane %v465, %v474
    %v477 = vunpack.c.l.s4 1983009808
    %v478 = vunpack.c.0.s8 %v477
    %v479 = vlaneseq
    %v480 = vshrl.u32 %v479, 7
    %v481 = vsub.s32 %v478, %v480
    %v482 = vrot.slane %v466, %v481
    %v484 = vunpack.c.l.s4 1983009808
    %v485 = vunpack.c.0.s8 %v484
    %v486 = vlaneseq
    %v487 = vshrl.u32 %v486, 7
    %v488 = vsub.s32 %v485, %v487
    %v489 = vrot.slane %v467, %v488
    %v491 = vunpack.c.l.s4 1983009808
    %v492 = vunpack.c.0.s8 %v491
    %v493 = vlaneseq
    %v494 = vshrl.u32 %v493, 7
    %v495 = vsub.s32 %v492, %v494
    %v496 = vrot.slane %v468, %v495
    %v497 = vcombine.low %v475, %v489
    %v498 = vcombine.high %v475, %v489
    %v499 = vcombine.low %v482, %v496
    %v500 = vcombine.high %v482, %v496
    %v501 = vcombine.low %v148, %v150
    %v502 = vcombine.low %v152, %v154
    %v504 = vunpack.c.l.s4 1983009808
    %v505 = vunpack.c.0.s8 %v504
    %v506 = vlaneseq
    %v507 = vshrl.u32 %v506, 7
    %v508 = vsub.s32 %v505, %v507
    %v509 = vrot.slane %v501, %v508
    %v511 = vunpack.c.l.s4 1983009808
    %v512 = vunpack.c.0.s8 %v511
    %v513 = vlaneseq
    %v514 = vshrl.u32 %v513, 7
    %v515 = vsub.s32 %v512, %v514
    %v516 = vrot.slane %v502, %v515
    %v517 = vcombine.low %v509, %v516
    %vm522 = vcmask 392192
    %v523 = vsel %vm522, %v517, 0
    %525 = vmatprep.subr.mxu0 %v216
    %526 = vmatpush1.msra.mxu0 %v215
    %527 = vmatprep.subr.mxu0 %v212
    %528 = vmatpush1.msra.mxu0 %v211
    %529 = vmatprep.subr.mxu0 %v208
    %530 = vmatpush1.msra.mxu0 %v207
    %531 = vmatprep.subr.mxu0 %v204
    %532 = vmatpush1.msra.mxu0 %v203
    %533 = vmatprep.subr.mxu0 %v200
    %534 = vmatpush1.msra.mxu0 %v199
    %535 = vmatprep.subr.mxu0 %v196
    %536 = vmatpush1.msra.mxu0 %v195
    %537 = vmatprep.subr.mxu0 %v192
    %538 = vmatpush1.msra.mxu0 %v191
    %539 = vmatprep.subr.mxu0 %v188
    %540 = vmatpush1.msra.mxu0 %v187
    %541 = vmatprep.subr.mxu0 %v184
    %542 = vmatpush1.msra.mxu0 %v183
    %543 = vmatprep.subr.mxu0 %v180
    %544 = vmatpush1.msra.mxu0 %v179
    %545 = vmatprep.subr.mxu0 %v176
    %546 = vmatpush1.msra.mxu0 %v175
    %547 = vmatprep.subr.mxu0 %v172
    %548 = vmatpush1.msra.mxu0 %v171
    %549 = vmatprep.subr.mxu0 %v168
    %550 = vmatpush1.msra.mxu0 %v167
    %551 = vmatprep.subr.mxu0 %v164
    %552 = vmatpush1.msra.mxu0 %v163
    %553 = vmatprep.subr.mxu0 %v160
    %554 = vmatpush1.msra.mxu0 %v159
    %555 = vmatprep.subr.mxu0 %v156
    %556 = vmatpush1.msra.mxu0 %v155
    %557 = vmatprep.subr.mxu0 %v280
    %558 = vmatpush2.msra.mxu0 %v279
    %559 = vmatprep.subr.mxu0 %v276
    %560 = vmatpush2.msra.mxu0 %v275
    %561 = vmatprep.subr.mxu0 %v272
    %562 = vmatpush2.msra.mxu0 %v271
    %563 = vmatprep.subr.mxu0 %v268
    %564 = vmatpush2.msra.mxu0 %v267
    %565 = vmatprep.subr.mxu0 %v264
    %566 = vmatpush2.msra.mxu0 %v263
    %567 = vmatprep.subr.mxu0 %v260
    %568 = vmatpush2.msra.mxu0 %v259
    %569 = vmatprep.subr.mxu0 %v256
    %570 = vmatpush2.msra.mxu0 %v255
    %571 = vmatprep.subr.mxu0 %v252
    %572 = vmatpush2.msra.mxu0 %v251
    %573 = vmatprep.subr.mxu0 %v248
    %574 = vmatpush2.msra.mxu0 %v247
    %575 = vmatprep.subr.mxu0 %v244
    %576 = vmatpush2.msra.mxu0 %v243
    %577 = vmatprep.subr.mxu0 %v240
    %578 = vmatpush2.msra.mxu0 %v239
    %579 = vmatprep.subr.mxu0 %v236
    %580 = vmatpush2.msra.mxu0 %v235
    %581 = vmatprep.subr.mxu0 %v232
    %582 = vmatpush2.msra.mxu0 %v231
    %583 = vmatprep.subr.mxu0 %v228
    %584 = vmatpush2.msra.mxu0 %v227
    %585 = vmatprep.subr.mxu0 %v224
    %586 = vmatpush2.msra.mxu0 %v223
    %587 = vmatprep.subr.mxu0 %v220
    %588 = vmatpush2.msra.mxu0 %v219
    %589 = vmatprep.mubr.f32.mxu0 %v498
    %590 = vmatmul.mubr.f32.gmra.mxu0 %v497
    %v591 = vpop.f32.mrf.mxu0
    %v592 = vadd.f32 %v440, %v591
    %v593 = vpop.f32.mrf.mxu0
    %v594 = vadd.f32 %v444, %v593
    %595 = vdwg.mxu0
    %596 = vmatprep.subr.mxu0 %v344
    %597 = vmatpush1.msra.mxu0 %v343
    %598 = vmatprep.subr.mxu0 %v340
    %599 = vmatpush1.msra.mxu0 %v339
    %600 = vmatprep.subr.mxu0 %v336
    %601 = vmatpush1.msra.mxu0 %v335
    %602 = vmatprep.subr.mxu0 %v332
    %603 = vmatpush1.msra.mxu0 %v331
    %604 = vmatprep.subr.mxu0 %v328
    %605 = vmatpush1.msra.mxu0 %v327
    %606 = vmatprep.subr.mxu0 %v324
    %607 = vmatpush1.msra.mxu0 %v323
    %608 = vmatprep.subr.mxu0 %v320
    %609 = vmatpush1.msra.mxu0 %v319
    %610 = vmatprep.subr.mxu0 %v316
    %611 = vmatpush1.msra.mxu0 %v315
    %612 = vmatprep.subr.mxu0 %v312
    %613 = vmatpush1.msra.mxu0 %v311
    %614 = vmatprep.subr.mxu0 %v308
    %615 = vmatpush1.msra.mxu0 %v307
    %616 = vmatprep.subr.mxu0 %v304
    %617 = vmatpush1.msra.mxu0 %v303
    %618 = vmatprep.subr.mxu0 %v300
    %619 = vmatpush1.msra.mxu0 %v299
    %620 = vmatprep.subr.mxu0 %v296
    %621 = vmatpush1.msra.mxu0 %v295
    %622 = vmatprep.subr.mxu0 %v292
    %623 = vmatpush1.msra.mxu0 %v291
    %624 = vmatprep.subr.mxu0 %v288
    %625 = vmatpush1.msra.mxu0 %v287
    %626 = vmatprep.subr.mxu0 %v284
    %627 = vmatpush1.msra.mxu0 %v283
    %628 = vmatprep.subr.mxu0 %v408
    %629 = vmatpush2.msra.mxu0 %v407
    %630 = vmatprep.subr.mxu0 %v404
    %631 = vmatpush2.msra.mxu0 %v403
    %632 = vmatprep.subr.mxu0 %v400
    %633 = vmatpush2.msra.mxu0 %v399
    %634 = vmatprep.subr.mxu0 %v396
    %635 = vmatpush2.msra.mxu0 %v395
    %636 = vmatprep.subr.mxu0 %v392
    %637 = vmatpush2.msra.mxu0 %v391
    %638 = vmatprep.subr.mxu0 %v388
    %639 = vmatpush2.msra.mxu0 %v387
    %640 = vmatprep.subr.mxu0 %v384
    %641 = vmatpush2.msra.mxu0 %v383
    %642 = vmatprep.subr.mxu0 %v380
    %643 = vmatpush2.msra.mxu0 %v379
    %644 = vmatprep.subr.mxu0 %v376
    %645 = vmatpush2.msra.mxu0 %v375
    %646 = vmatprep.subr.mxu0 %v372
    %647 = vmatpush2.msra.mxu0 %v371
    %648 = vmatprep.subr.mxu0 %v368
    %649 = vmatpush2.msra.mxu0 %v367
    %650 = vmatprep.subr.mxu0 %v364
    %651 = vmatpush2.msra.mxu0 %v363
    %652 = vmatprep.subr.mxu0 %v360
    %653 = vmatpush2.msra.mxu0 %v359
    %654 = vmatprep.subr.mxu0 %v356
    %655 = vmatpush2.msra.mxu0 %v355
    %656 = vmatprep.subr.mxu0 %v352
    %657 = vmatpush2.msra.mxu0 %v351
    %658 = vmatprep.subr.mxu0 %v348
    %659 = vmatpush2.msra.mxu0 %v347
    %660 = vmatprep.mubr.f32.mxu0 %v500
    %661 = vmatmul.mubr.f32.gmra.mxu0 %v499
    %v662 = vpop.f32.mrf.mxu0
    %v663 = vadd.f32 %v592, %v662
    %v664 = vpop.f32.mrf.mxu0
    %v665 = vadd.f32 %v594, %v664
    %666 = vdwg.mxu0
    %667 = vmatprep.subr.mxu0 0.0
    %668 = vmatpush1.msra.mxu0 0.0
    %669 = vmatprep.subr.mxu0 0.0
    %670 = vmatpush1.msra.mxu0 0.0
    %671 = vmatprep.subr.mxu0 0.0
    %672 = vmatpush1.msra.mxu0 0.0
    %673 = vmatprep.subr.mxu0 0.0
    %674 = vmatpush1.msra.mxu0 0.0
    %675 = vmatprep.subr.mxu0 0.0
    %676 = vmatpush1.msra.mxu0 0.0
    %677 = vmatprep.subr.mxu0 0.0
    %678 = vmatpush1.msra.mxu0 0.0
    %679 = vmatprep.subr.mxu0 0.0
    %680 = vmatpush1.msra.mxu0 0.0
    %681 = vmatprep.subr.mxu0 0.0
    %682 = vmatpush1.msra.mxu0 0.0
    %683 = vmatprep.subr.mxu0 0.0
    %684 = vmatpush1.msra.mxu0 0.0
    %685 = vmatprep.subr.mxu0 0.0
    %686 = vmatpush1.msra.mxu0 0.0
    %687 = vmatprep.subr.mxu0 %v432
    %688 = vmatpush1.msra.mxu0 %v431
    %689 = vmatprep.subr.mxu0 %v428
    %690 = vmatpush1.msra.mxu0 %v427
    %691 = vmatprep.subr.mxu0 %v424
    %692 = vmatpush1.msra.mxu0 %v423
    %693 = vmatprep.subr.mxu0 %v420
    %694 = vmatpush1.msra.mxu0 %v419
    %695 = vmatprep.subr.mxu0 %v416
    %696 = vmatpush1.msra.mxu0 %v415
    %697 = vmatprep.subr.mxu0 %v412
    %698 = vmatpush1.msra.mxu0 %v411
    %699 = vmatprep.subr.mxu0 0.0
    %700 = vmatpush2.msra.mxu0 0.0
    %701 = vmatprep.subr.mxu0 0.0
    %702 = vmatpush2.msra.mxu0 0.0
    %703 = vmatprep.subr.mxu0 0.0
    %704 = vmatpush2.msra.mxu0 0.0
    %705 = vmatprep.subr.mxu0 0.0
    %706 = vmatpush2.msra.mxu0 0.0
    %707 = vmatprep.subr.mxu0 0.0
    %708 = vmatpush2.msra.mxu0 0.0
    %709 = vmatprep.subr.mxu0 0.0
    %710 = vmatpush2.msra.mxu0 0.0
    %711 = vmatprep.subr.mxu0 0.0
    %712 = vmatpush2.msra.mxu0 0.0
    %713 = vmatprep.subr.mxu0 0.0
    %714 = vmatpush2.msra.mxu0 0.0
    %715 = vmatprep.subr.mxu0 0.0
    %716 = vmatpush2.msra.mxu0 0.0
    %717 = vmatprep.subr.mxu0 0.0
    %718 = vmatpush2.msra.mxu0 0.0
    %719 = vmatprep.subr.mxu0 0.0
    %720 = vmatpush2.msra.mxu0 0.0
    %721 = vmatprep.subr.mxu0 0.0
    %722 = vmatpush2.msra.mxu0 0.0
    %723 = vmatprep.subr.mxu0 0.0
    %724 = vmatpush2.msra.mxu0 0.0
    %725 = vmatprep.subr.mxu0 0.0
    %726 = vmatpush2.msra.mxu0 0.0
    %727 = vmatprep.subr.mxu0 0.0
    %728 = vmatpush2.msra.mxu0 0.0
    %729 = vmatprep.subr.mxu0 0.0
    %730 = vmatpush2.msra.mxu0 0.0
    %731 = vmatprep.mubr.f32.mxu0 0.0
    %732 = vmatmul.mubr.f32.gmra.mxu0 %v523
    %v733 = vpop.f32.mrf.mxu0
    %v734 = vadd.f32 %v663, %v733
    %v735 = vpop.f32.mrf.mxu0
    %v736 = vadd.f32 %v665, %v735
    %737 = vdwg.mxu0
    %738 = vmatprep.subr.mxu0 %v218
    %739 = vmatpush1.msra.mxu0 %v217
    %740 = vmatprep.subr.mxu0 %v214
    %741 = vmatpush1.msra.mxu0 %v213
    %742 = vmatprep.subr.mxu0 %v210
    %743 = vmatpush1.msra.mxu0 %v209
    %744 = vmatprep.subr.mxu0 %v206
    %745 = vmatpush1.msra.mxu0 %v205
    %746 = vmatprep.subr.mxu0 %v202
    %747 = vmatpush1.msra.mxu0 %v201
    %748 = vmatprep.subr.mxu0 %v198
    %749 = vmatpush1.msra.mxu0 %v197
    %750 = vmatprep.subr.mxu0 %v194
    %751 = vmatpush1.msra.mxu0 %v193
    %752 = vmatprep.subr.mxu0 %v190
    %753 = vmatpush1.msra.mxu0 %v189
    %754 = vmatprep.subr.mxu0 %v186
    %755 = vmatpush1.msra.mxu0 %v185
    %756 = vmatprep.subr.mxu0 %v182
    %757 = vmatpush1.msra.mxu0 %v181
    %758 = vmatprep.subr.mxu0 %v178
    %759 = vmatpush1.msra.mxu0 %v177
    %760 = vmatprep.subr.mxu0 %v174
    %761 = vmatpush1.msra.mxu0 %v173
    %762 = vmatprep.subr.mxu0 %v170
    %763 = vmatpush1.msra.mxu0 %v169
    %764 = vmatprep.subr.mxu0 %v166
    %765 = vmatpush1.msra.mxu0 %v165
    %766 = vmatprep.subr.mxu0 %v162
    %767 = vmatpush1.msra.mxu0 %v161
    %768 = vmatprep.subr.mxu0 %v158
    %769 = vmatpush1.msra.mxu0 %v157
    %770 = vmatprep.subr.mxu0 %v282
    %771 = vmatpush2.msra.mxu0 %v281
    %772 = vmatprep.subr.mxu0 %v278
    %773 = vmatpush2.msra.mxu0 %v277
    %774 = vmatprep.subr.mxu0 %v274
    %775 = vmatpush2.msra.mxu0 %v273
    %776 = vmatprep.subr.mxu0 %v270
    %777 = vmatpush2.msra.mxu0 %v269
    %778 = vmatprep.subr.mxu0 %v266
    %779 = vmatpush2.msra.mxu0 %v265
    %780 = vmatprep.subr.mxu0 %v262
    %781 = vmatpush2.msra.mxu0 %v261
    %782 = vmatprep.subr.mxu0 %v258
    %783 = vmatpush2.msra.mxu0 %v257
    %784 = vmatprep.subr.mxu0 %v254
    %785 = vmatpush2.msra.mxu0 %v253
    %786 = vmatprep.subr.mxu0 %v250
    %787 = vmatpush2.msra.mxu0 %v249
    %788 = vmatprep.subr.mxu0 %v246
    %789 = vmatpush2.msra.mxu0 %v245
    %790 = vmatprep.subr.mxu0 %v242
    %791 = vmatpush2.msra.mxu0 %v241
    %792 = vmatprep.subr.mxu0 %v238
    %793 = vmatpush2.msra.mxu0 %v237
    %794 = vmatprep.subr.mxu0 %v234
    %795 = vmatpush2.msra.mxu0 %v233
    %796 = vmatprep.subr.mxu0 %v230
    %797 = vmatpush2.msra.mxu0 %v229
    %798 = vmatprep.subr.mxu0 %v226
    %799 = vmatpush2.msra.mxu0 %v225
    %800 = vmatprep.subr.mxu0 %v222
    %801 = vmatpush2.msra.mxu0 %v221
    %802 = vmatprep.mubr.f32.mxu0 %v498
    %803 = vmatmul.mubr.f32.gmra.mxu0 %v497
    %v804 = vpop.f32.mrf.mxu0
    %v805 = vadd.f32 %v448, %v804
    %v806 = vpop.f32.mrf.mxu0
    %v807 = vadd.f32 %v452, %v806
    %808 = vdwg.mxu0
    %809 = vmatprep.subr.mxu0 %v346
    %810 = vmatpush1.msra.mxu0 %v345
    %811 = vmatprep.subr.mxu0 %v342
    %812 = vmatpush1.msra.mxu0 %v341
    %813 = vmatprep.subr.mxu0 %v338
    %814 = vmatpush1.msra.mxu0 %v337
    %815 = vmatprep.subr.mxu0 %v334
    %816 = vmatpush1.msra.mxu0 %v333
    %817 = vmatprep.subr.mxu0 %v330
    %818 = vmatpush1.msra.mxu0 %v329
    %819 = vmatprep.subr.mxu0 %v326
    %820 = vmatpush1.msra.mxu0 %v325
    %821 = vmatprep.subr.mxu0 %v322
    %822 = vmatpush1.msra.mxu0 %v321
    %823 = vmatprep.subr.mxu0 %v318
    %824 = vmatpush1.msra.mxu0 %v317
    %825 = vmatprep.subr.mxu0 %v314
    %826 = vmatpush1.msra.mxu0 %v313
    %827 = vmatprep.subr.mxu0 %v310
    %828 = vmatpush1.msra.mxu0 %v309
    %829 = vmatprep.subr.mxu0 %v306
    %830 = vmatpush1.msra.mxu0 %v305
    %831 = vmatprep.subr.mxu0 %v302
    %832 = vmatpush1.msra.mxu0 %v301
    %833 = vmatprep.subr.mxu0 %v298
    %834 = vmatpush1.msra.mxu0 %v297
    %835 = vmatprep.subr.mxu0 %v294
    %836 = vmatpush1.msra.mxu0 %v293
    %837 = vmatprep.subr.mxu0 %v290
    %838 = vmatpush1.msra.mxu0 %v289
    %839 = vmatprep.subr.mxu0 %v286
    %840 = vmatpush1.msra.mxu0 %v285
    %841 = vmatprep.subr.mxu0 %v410
    %842 = vmatpush2.msra.mxu0 %v409
    %843 = vmatprep.subr.mxu0 %v406
    %844 = vmatpush2.msra.mxu0 %v405
    %845 = vmatprep.subr.mxu0 %v402
    %846 = vmatpush2.msra.mxu0 %v401
    %847 = vmatprep.subr.mxu0 %v398
    %848 = vmatpush2.msra.mxu0 %v397
    %849 = vmatprep.subr.mxu0 %v394
    %850 = vmatpush2.msra.mxu0 %v393
    %851 = vmatprep.subr.mxu0 %v390
    %852 = vmatpush2.msra.mxu0 %v389
    %853 = vmatprep.subr.mxu0 %v386
    %854 = vmatpush2.msra.mxu0 %v385
    %855 = vmatprep.subr.mxu0 %v382
    %856 = vmatpush2.msra.mxu0 %v381
    %857 = vmatprep.subr.mxu0 %v378
    %858 = vmatpush2.msra.mxu0 %v377
    %859 = vmatprep.subr.mxu0 %v374
    %860 = vmatpush2.msra.mxu0 %v373
    %861 = vmatprep.subr.mxu0 %v370
    %862 = vmatpush2.msra.mxu0 %v369
    %863 = vmatprep.subr.mxu0 %v366
    %864 = vmatpush2.msra.mxu0 %v365
    %865 = vmatprep.subr.mxu0 %v362
    %866 = vmatpush2.msra.mxu0 %v361
    %867 = vmatprep.subr.mxu0 %v358
    %868 = vmatpush2.msra.mxu0 %v357
    %869 = vmatprep.subr.mxu0 %v354
    %870 = vmatpush2.msra.mxu0 %v353
    %871 = vmatprep.subr.mxu0 %v350
    %872 = vmatpush2.msra.mxu0 %v349
    %873 = vmatprep.mubr.f32.mxu0 %v500
    %874 = vmatmul.mubr.f32.gmra.mxu0 %v499
    %v875 = vpop.f32.mrf.mxu0
    %v876 = vadd.f32 %v805, %v875
    %v877 = vpop.f32.mrf.mxu0
    %v878 = vadd.f32 %v807, %v877
    %879 = vdwg.mxu0
    %880 = vmatprep.subr.mxu0 0.0
    %881 = vmatpush1.msra.mxu0 0.0
    %882 = vmatprep.subr.mxu0 0.0
    %883 = vmatpush1.msra.mxu0 0.0
    %884 = vmatprep.subr.mxu0 0.0
    %885 = vmatpush1.msra.mxu0 0.0
    %886 = vmatprep.subr.mxu0 0.0
    %887 = vmatpush1.msra.mxu0 0.0
    %888 = vmatprep.subr.mxu0 0.0
    %889 = vmatpush1.msra.mxu0 0.0
    %890 = vmatprep.subr.mxu0 0.0
    %891 = vmatpush1.msra.mxu0 0.0
    %892 = vmatprep.subr.mxu0 0.0
    %893 = vmatpush1.msra.mxu0 0.0
    %894 = vmatprep.subr.mxu0 0.0
    %895 = vmatpush1.msra.mxu0 0.0
    %896 = vmatprep.subr.mxu0 0.0
    %897 = vmatpush1.msra.mxu0 0.0
    %898 = vmatprep.subr.mxu0 0.0
    %899 = vmatpush1.msra.mxu0 0.0
    %900 = vmatprep.subr.mxu0 %v434
    %901 = vmatpush1.msra.mxu0 %v433
    %902 = vmatprep.subr.mxu0 %v430
    %903 = vmatpush1.msra.mxu0 %v429
    %904 = vmatprep.subr.mxu0 %v426
    %905 = vmatpush1.msra.mxu0 %v425
    %906 = vmatprep.subr.mxu0 %v422
    %907 = vmatpush1.msra.mxu0 %v421
    %908 = vmatprep.subr.mxu0 %v418
    %909 = vmatpush1.msra.mxu0 %v417
    %910 = vmatprep.subr.mxu0 %v414
    %911 = vmatpush1.msra.mxu0 %v413
    %912 = vmatprep.subr.mxu0 0.0
    %913 = vmatpush2.msra.mxu0 0.0
    %914 = vmatprep.subr.mxu0 0.0
    %915 = vmatpush2.msra.mxu0 0.0
    %916 = vmatprep.subr.mxu0 0.0
    %917 = vmatpush2.msra.mxu0 0.0
    %918 = vmatprep.subr.mxu0 0.0
    %919 = vmatpush2.msra.mxu0 0.0
    %920 = vmatprep.subr.mxu0 0.0
    %921 = vmatpush2.msra.mxu0 0.0
    %922 = vmatprep.subr.mxu0 0.0
    %923 = vmatpush2.msra.mxu0 0.0
    %924 = vmatprep.subr.mxu0 0.0
    %925 = vmatpush2.msra.mxu0 0.0
    %926 = vmatprep.subr.mxu0 0.0
    %927 = vmatpush2.msra.mxu0 0.0
    %928 = vmatprep.subr.mxu0 0.0
    %929 = vmatpush2.msra.mxu0 0.0
    %930 = vmatprep.subr.mxu0 0.0
    %931 = vmatpush2.msra.mxu0 0.0
    %932 = vmatprep.subr.mxu0 0.0
    %933 = vmatpush2.msra.mxu0 0.0
    %934 = vmatprep.subr.mxu0 0.0
    %935 = vmatpush2.msra.mxu0 0.0
    %936 = vmatprep.subr.mxu0 0.0
    %937 = vmatpush2.msra.mxu0 0.0
    %938 = vmatprep.subr.mxu0 0.0
    %939 = vmatpush2.msra.mxu0 0.0
    %940 = vmatprep.subr.mxu0 0.0
    %941 = vmatpush2.msra.mxu0 0.0
    %942 = vmatprep.subr.mxu0 0.0
    %943 = vmatpush2.msra.mxu0 0.0
    %944 = vmatprep.mubr.f32.mxu0 0.0
    %945 = vmatmul.mubr.f32.gmra.mxu0 %v523
    %v946 = vpop.f32.mrf.mxu0
    %v947 = vadd.f32 %v876, %v946
    %v948 = vpop.f32.mrf.mxu0
    %v949 = vadd.f32 %v878, %v948
    %950 = vdwg.mxu0
    %vm951 = vcmp.ge.f32.partialorder %v734, 0.0
    %vm952 = vcmp.ge.f32.partialorder %v736, 0.0
    %vm953 = vcmp.ge.f32.partialorder %v947, 0.0
    %vm954 = vcmp.ge.f32.partialorder %v949, 0.0
    %v955 = vmul.f32 %v734, 0.01
    %v956 = vmul.f32 %v736, 0.01
    %v957 = vmul.f32 %v947, 0.01
    %v958 = vmul.f32 %v949, 0.01
    %v959 = vsel %vm951, %v734, %v955
    %v960 = vsel %vm952, %v736, %v956
    %v961 = vsel %vm953, %v947, %v957
    %v962 = vsel %vm954, %v949, %v958
    %v963 = vld [vmem:[#allocation8] sm:$0xff]
    %v964 = vld [vmem:[#allocation8 + $0x8] sm:$0xff]
    %v965 = vld [vmem:[#allocation8 + $0x10] sm:$0xff]
    %v966 = vld [vmem:[#allocation8 + $0x18] sm:$0xff]
    %v967 = vld [vmem:[#allocation8 + $0x20] sm:$0xff]
    %v968 = vld [vmem:[#allocation8 + $0x28] sm:$0xff]
    %v969 = vld [vmem:[#allocation8 + $0x30] sm:$0xff]
    %v970 = vld [vmem:[#allocation8 + $0x38] sm:$0xff]
    %v971 = vld [vmem:[#allocation8 + $0x40] sm:$0xff]
    %v972 = vld [vmem:[#allocation8 + $0x48] sm:$0xff]
    %v973 = vld [vmem:[#allocation8 + $0x50] sm:$0xff]
    %v974 = vld [vmem:[#allocation8 + $0x58] sm:$0xff]
    %v975 = vld [vmem:[#allocation8 + $0x60] sm:$0xff]
    %v976 = vld [vmem:[#allocation8 + $0x68] sm:$0xff]
    %v977 = vld [vmem:[#allocation8 + $0x70] sm:$0xff]
    %v978 = vld [vmem:[#allocation8 + $0x78] sm:$0xff]
    %v979 = vld [vmem:[#allocation8 + $0x80] sm:$0xff]
    %v980 = vld [vmem:[#allocation8 + $0x88] sm:$0xff]
    %v981 = vld [vmem:[#allocation8 + $0x90] sm:$0xff]
    %v982 = vld [vmem:[#allocation8 + $0x98] sm:$0xff]
    %v983 = vld [vmem:[#allocation8 + $0xa0] sm:$0xff]
    %v984 = vld [vmem:[#allocation8 + $0xa8] sm:$0xff]
    %v985 = vld [vmem:[#allocation8 + $0xb0] sm:$0xff]
    %v986 = vld [vmem:[#allocation8 + $0xb8] sm:$0xff]
    %v987 = vld [vmem:[#allocation8 + $0xc0] sm:$0xff]
    %v988 = vld [vmem:[#allocation8 + $0xc8] sm:$0xff]
    %v989 = vld [vmem:[#allocation8 + $0xd0] sm:$0xff]
    %v990 = vld [vmem:[#allocation8 + $0xd8] sm:$0xff]
    %v991 = vld [vmem:[#allocation8 + $0xe0] sm:$0xff]
    %v992 = vld [vmem:[#allocation8 + $0xe8] sm:$0xff]
    %v993 = vld [vmem:[#allocation8 + $0xf0] sm:$0xff]
    %v994 = vld [vmem:[#allocation8 + $0xf8] sm:$0xff]
    %v995 = vld [vmem:[#allocation8 + $0x100] sm:$0xff]
    %v996 = vld [vmem:[#allocation8 + $0x108] sm:$0xff]
    %v997 = vld [vmem:[#allocation8 + $0x110] sm:$0xff]
    %v998 = vld [vmem:[#allocation8 + $0x118] sm:$0xff]
    %v999 = vld [vmem:[#allocation8 + $0x120] sm:$0xff]
    %v1000 = vld [vmem:[#allocation8 + $0x128] sm:$0xff]
    %v1001 = vld [vmem:[#allocation8 + $0x130] sm:$0xff]
    %v1002 = vld [vmem:[#allocation8 + $0x138] sm:$0xff]
    %v1003 = vld [vmem:[#allocation8 + $0x140] sm:$0xff]
    %v1004 = vld [vmem:[#allocation8 + $0x148] sm:$0xff]
    %v1005 = vld [vmem:[#allocation8 + $0x150] sm:$0xff]
    %v1006 = vld [vmem:[#allocation8 + $0x158] sm:$0xff]
    %v1007 = vld [vmem:[#allocation8 + $0x160] sm:$0xff]
    %v1008 = vld [vmem:[#allocation8 + $0x168] sm:$0xff]
    %v1009 = vld [vmem:[#allocation8 + $0x170] sm:$0xff]
    %v1010 = vld [vmem:[#allocation8 + $0x178] sm:$0xff]
    %v1011 = vld [vmem:[#allocation8 + $0x180] sm:$0xff]
    %v1012 = vld [vmem:[#allocation8 + $0x188] sm:$0xff]
    %v1013 = vld [vmem:[#allocation8 + $0x190] sm:$0xff]
    %v1014 = vld [vmem:[#allocation8 + $0x198] sm:$0xff]
    %v1015 = vld [vmem:[#allocation8 + $0x1a0] sm:$0xff]
    %v1016 = vld [vmem:[#allocation8 + $0x1a8] sm:$0xff]
    %v1017 = vld [vmem:[#allocation8 + $0x1b0] sm:$0xff]
    %v1018 = vld [vmem:[#allocation8 + $0x1b8] sm:$0xff]
    %v1019 = vld [vmem:[#allocation8 + $0x1c0] sm:$0xff]
    %v1020 = vld [vmem:[#allocation8 + $0x1c8] sm:$0xff]
    %v1021 = vld [vmem:[#allocation8 + $0x1d0] sm:$0xff]
    %v1022 = vld [vmem:[#allocation8 + $0x1d8] sm:$0xff]
    %v1023 = vld [vmem:[#allocation8 + $0x1e0] sm:$0xff]
    %v1024 = vld [vmem:[#allocation8 + $0x1e8] sm:$0xff]
    %v1025 = vld [vmem:[#allocation8 + $0x1f0] sm:$0xff]
    %v1026 = vld [vmem:[#allocation8 + $0x1f8] sm:$0xff]
    %v1027 = vld [vmem:[#allocation8 + $0x200] sm:$0xff]
    %v1028 = vld [vmem:[#allocation8 + $0x208] sm:$0xff]
    %v1029 = vld [vmem:[#allocation8 + $0x210] sm:$0xff]
    %v1030 = vld [vmem:[#allocation8 + $0x218] sm:$0xff]
    %v1031 = vld [vmem:[#allocation8 + $0x220] sm:$0xff]
    %v1032 = vld [vmem:[#allocation8 + $0x228] sm:$0xff]
    %v1033 = vld [vmem:[#allocation8 + $0x230] sm:$0xff]
    %v1034 = vld [vmem:[#allocation8 + $0x238] sm:$0xff]
    %v1035 = vld [vmem:[#allocation8 + $0x240] sm:$0xff]
    %v1036 = vld [vmem:[#allocation8 + $0x248] sm:$0xff]
    %v1037 = vld [vmem:[#allocation8 + $0x250] sm:$0xff]
    %v1038 = vld [vmem:[#allocation8 + $0x258] sm:$0xff]
    %v1039 = vld [vmem:[#allocation8 + $0x260] sm:$0xff]
    %v1040 = vld [vmem:[#allocation8 + $0x268] sm:$0xff]
    %v1041 = vld [vmem:[#allocation8 + $0x270] sm:$0xff]
    %v1042 = vld [vmem:[#allocation8 + $0x278] sm:$0xff]
    %v1043 = vld [vmem:[#allocation8 + $0x280] sm:$0xff]
    %v1044 = vld [vmem:[#allocation8 + $0x288] sm:$0xff]
    %v1045 = vld [vmem:[#allocation8 + $0x290] sm:$0xff]
    %v1046 = vld [vmem:[#allocation8 + $0x298] sm:$0xff]
    %v1047 = vld [vmem:[#allocation8 + $0x2a0] sm:$0xff]
    %v1048 = vld [vmem:[#allocation8 + $0x2a8] sm:$0xff]
    %v1049 = vld [vmem:[#allocation8 + $0x2b0] sm:$0xff]
    %v1050 = vld [vmem:[#allocation8 + $0x2b8] sm:$0xff]
    %v1051 = vld [vmem:[#allocation8 + $0x2c0] sm:$0xff]
    %v1052 = vld [vmem:[#allocation8 + $0x2c8] sm:$0xff]
    %v1053 = vld [vmem:[#allocation8 + $0x2d0] sm:$0xff]
    %v1054 = vld [vmem:[#allocation8 + $0x2d8] sm:$0xff]
    %v1055 = vld [vmem:[#allocation8 + $0x2e0] sm:$0xff]
    %v1056 = vld [vmem:[#allocation8 + $0x2e8] sm:$0xff]
    %v1057 = vld [vmem:[#allocation8 + $0x2f0] sm:$0xff]
    %v1058 = vld [vmem:[#allocation8 + $0x2f8] sm:$0xff]
    %v1059 = vld [vmem:[#allocation8 + $0x300] sm:$0xff]
    %v1060 = vld [vmem:[#allocation8 + $0x308] sm:$0xff]
    %v1061 = vld [vmem:[#allocation8 + $0x310] sm:$0xff]
    %v1062 = vld [vmem:[#allocation8 + $0x318] sm:$0xff]
    %v1063 = vld [vmem:[#allocation8 + $0x320] sm:$0xff]
    %v1064 = vld [vmem:[#allocation8 + $0x328] sm:$0xff]
    %v1065 = vld [vmem:[#allocation8 + $0x330] sm:$0xff]
    %v1066 = vld [vmem:[#allocation8 + $0x338] sm:$0xff]
    %v1067 = vld [vmem:[#allocation8 + $0x340] sm:$0xff]
    %v1068 = vld [vmem:[#allocation8 + $0x348] sm:$0xff]
    %v1069 = vld [vmem:[#allocation8 + $0x350] sm:$0xff]
    %v1070 = vld [vmem:[#allocation8 + $0x358] sm:$0xff]
    %v1071 = vld [vmem:[#allocation8 + $0x360] sm:$0xff]
    %v1072 = vld [vmem:[#allocation8 + $0x368] sm:$0xff]
    %v1073 = vld [vmem:[#allocation8 + $0x370] sm:$0xff]
    %v1074 = vld [vmem:[#allocation8 + $0x378] sm:$0xff]
    %v1075 = vld [vmem:[#allocation8 + $0x380] sm:$0xff]
    %v1076 = vld [vmem:[#allocation8 + $0x388] sm:$0xff]
    %v1077 = vld [vmem:[#allocation8 + $0x390] sm:$0xff]
    %v1078 = vld [vmem:[#allocation8 + $0x398] sm:$0xff]
    %v1079 = vld [vmem:[#allocation8 + $0x3a0] sm:$0xff]
    %v1080 = vld [vmem:[#allocation8 + $0x3a8] sm:$0xff]
    %v1081 = vld [vmem:[#allocation8 + $0x3b0] sm:$0xff]
    %v1082 = vld [vmem:[#allocation8 + $0x3b8] sm:$0xff]
    %v1083 = vld [vmem:[#allocation8 + $0x3c0] sm:$0xff]
    %v1084 = vld [vmem:[#allocation8 + $0x3c8] sm:$0xff]
    %v1085 = vld [vmem:[#allocation8 + $0x3d0] sm:$0xff]
    %v1086 = vld [vmem:[#allocation8 + $0x3d8] sm:$0xff]
    %v1087 = vld [vmem:[#allocation8 + $0x3e0] sm:$0xff]
    %v1088 = vld [vmem:[#allocation8 + $0x3e8] sm:$0xff]
    %v1089 = vld [vmem:[#allocation8 + $0x3f0] sm:$0xff]
    %v1090 = vld [vmem:[#allocation8 + $0x3f8] sm:$0xff]
    %v1091 = vld [vmem:[#allocation8 + $0x400] sm:$0xff]
    %v1092 = vld [vmem:[#allocation8 + $0x408] sm:$0xff]
    %v1093 = vld [vmem:[#allocation8 + $0x410] sm:$0xff]
    %v1094 = vld [vmem:[#allocation8 + $0x418] sm:$0xff]
    %v1095 = vld [vmem:[#allocation8 + $0x420] sm:$0xff]
    %v1096 = vld [vmem:[#allocation8 + $0x428] sm:$0xff]
    %v1097 = vld [vmem:[#allocation8 + $0x430] sm:$0xff]
    %v1098 = vld [vmem:[#allocation8 + $0x438] sm:$0xff]
    %v1099 = vld [vmem:[#allocation8 + $0x440] sm:$0xff]
    %v1100 = vld [vmem:[#allocation8 + $0x448] sm:$0xff]
    %v1101 = vld [vmem:[#allocation8 + $0x450] sm:$0xff]
    %v1102 = vld [vmem:[#allocation8 + $0x458] sm:$0xff]
    %v1103 = vld [vmem:[#allocation8 + $0x460] sm:$0xff]
    %v1104 = vld [vmem:[#allocation8 + $0x468] sm:$0xff]
    %v1105 = vld [vmem:[#allocation8 + $0x470] sm:$0xff]
    %v1106 = vld [vmem:[#allocation8 + $0x478] sm:$0xff]
    %v1107 = vld [vmem:[#allocation8 + $0x480] sm:$0xff]
    %v1108 = vld [vmem:[#allocation8 + $0x488] sm:$0xff]
    %v1109 = vld [vmem:[#allocation8 + $0x490] sm:$0xff]
    %v1110 = vld [vmem:[#allocation8 + $0x498] sm:$0xff]
    %v1111 = vld [vmem:[#allocation8 + $0x4a0] sm:$0xff]
    %v1112 = vld [vmem:[#allocation8 + $0x4a8] sm:$0xff]
    %v1113 = vld [vmem:[#allocation8 + $0x4b0] sm:$0xff]
    %v1114 = vld [vmem:[#allocation8 + $0x4b8] sm:$0xff]
    %v1115 = vld [vmem:[#allocation8 + $0x4c0] sm:$0xff]
    %v1116 = vld [vmem:[#allocation8 + $0x4c8] sm:$0xff]
    %v1117 = vld [vmem:[#allocation8 + $0x4d0] sm:$0xff]
    %v1118 = vld [vmem:[#allocation8 + $0x4d8] sm:$0xff]
    %v1119 = vld [vmem:[#allocation8 + $0x4e0] sm:$0xff]
    %v1120 = vld [vmem:[#allocation8 + $0x4e8] sm:$0xff]
    %v1121 = vld [vmem:[#allocation8 + $0x4f0] sm:$0xff]
    %v1122 = vld [vmem:[#allocation8 + $0x4f8] sm:$0xff]
    %v1123 = vld [vmem:[#allocation8 + $0x500] sm:$0xff]
    %v1124 = vld [vmem:[#allocation8 + $0x508] sm:$0xff]
    %v1125 = vld [vmem:[#allocation8 + $0x510] sm:$0xff]
    %v1126 = vld [vmem:[#allocation8 + $0x518] sm:$0xff]
    %v1127 = vld [vmem:[#allocation8 + $0x520] sm:$0xff]
    %v1128 = vld [vmem:[#allocation8 + $0x528] sm:$0xff]
    %v1129 = vld [vmem:[#allocation8 + $0x530] sm:$0xff]
    %v1130 = vld [vmem:[#allocation8 + $0x538] sm:$0xff]
    %v1131 = vld [vmem:[#allocation8 + $0x540] sm:$0xff]
    %v1132 = vld [vmem:[#allocation8 + $0x548] sm:$0xff]
    %v1133 = vld [vmem:[#allocation8 + $0x550] sm:$0xff]
    %v1134 = vld [vmem:[#allocation8 + $0x558] sm:$0xff]
    %v1135 = vld [vmem:[#allocation8 + $0x560] sm:$0xff]
    %v1136 = vld [vmem:[#allocation8 + $0x568] sm:$0xff]
    %v1137 = vld [vmem:[#allocation8 + $0x570] sm:$0xff]
    %v1138 = vld [vmem:[#allocation8 + $0x578] sm:$0xff]
    %v1139 = vld [vmem:[#allocation8 + $0x580] sm:$0xff]
    %v1140 = vld [vmem:[#allocation8 + $0x588] sm:$0xff]
    %v1141 = vld [vmem:[#allocation8 + $0x590] sm:$0xff]
    %v1142 = vld [vmem:[#allocation8 + $0x598] sm:$0xff]
    %v1143 = vld [vmem:[#allocation8 + $0x5a0] sm:$0xff]
    %v1144 = vld [vmem:[#allocation8 + $0x5a8] sm:$0xff]
    %v1145 = vld [vmem:[#allocation8 + $0x5b0] sm:$0xff]
    %v1146 = vld [vmem:[#allocation8 + $0x5b8] sm:$0xff]
    %v1147 = vld [vmem:[#allocation8 + $0x5c0] sm:$0xff]
    %v1148 = vld [vmem:[#allocation8 + $0x5c8] sm:$0xff]
    %v1149 = vld [vmem:[#allocation8 + $0x5d0] sm:$0xff]
    %v1150 = vld [vmem:[#allocation8 + $0x5d8] sm:$0xff]
    %v1151 = vld [vmem:[#allocation8 + $0x5e0] sm:$0xff]
    %v1152 = vld [vmem:[#allocation8 + $0x5e8] sm:$0xff]
    %v1153 = vld [vmem:[#allocation8 + $0x5f0] sm:$0xff]
    %v1154 = vld [vmem:[#allocation8 + $0x5f8] sm:$0xff]
    %v1155 = vld [vmem:[#allocation10] sm:$0x7]
    %v1157 = vlaneseq
    %v1158 = vshrl.u32 %v1157, 7
    %v1159 = vsub.s32 0, %v1158
    %v1160 = vrot.slane %v1155, %v1159
    %v1161 = vlaneseq
    %v1162 = vshrl.u32 %v1161, 7
    %v1163 = vsub.s32 1, %v1162
    %v1164 = vrot.slane %v1155, %v1163
    %v1165 = vlaneseq
    %v1166 = vshrl.u32 %v1165, 7
    %v1167 = vsub.s32 2, %v1166
    %v1168 = vrot.slane %v1155, %v1167
    %1172 = vmatprep.subr.mxu0 %v1009
    %1173 = vmatpush1.msra.mxu0 %v1008
    %1174 = vmatprep.subr.mxu0 %v1006
    %1175 = vmatpush1.msra.mxu0 %v1005
    %1176 = vmatprep.subr.mxu0 %v1003
    %1177 = vmatpush1.msra.mxu0 %v1002
    %1178 = vmatprep.subr.mxu0 %v1000
    %1179 = vmatpush1.msra.mxu0 %v999
    %1180 = vmatprep.subr.mxu0 %v997
    %1181 = vmatpush1.msra.mxu0 %v996
    %1182 = vmatprep.subr.mxu0 %v994
    %1183 = vmatpush1.msra.mxu0 %v993
    %1184 = vmatprep.subr.mxu0 %v991
    %1185 = vmatpush1.msra.mxu0 %v990
    %1186 = vmatprep.subr.mxu0 %v988
    %1187 = vmatpush1.msra.mxu0 %v987
    %1188 = vmatprep.subr.mxu0 %v985
    %1189 = vmatpush1.msra.mxu0 %v984
    %1190 = vmatprep.subr.mxu0 %v982
    %1191 = vmatpush1.msra.mxu0 %v981
    %1192 = vmatprep.subr.mxu0 %v979
    %1193 = vmatpush1.msra.mxu0 %v978
    %1194 = vmatprep.subr.mxu0 %v976
    %1195 = vmatpush1.msra.mxu0 %v975
    %1196 = vmatprep.subr.mxu0 %v973
    %1197 = vmatpush1.msra.mxu0 %v972
    %1198 = vmatprep.subr.mxu0 %v970
    %1199 = vmatpush1.msra.mxu0 %v969
    %1200 = vmatprep.subr.mxu0 %v967
    %1201 = vmatpush1.msra.mxu0 %v966
    %1202 = vmatprep.subr.mxu0 %v964
    %1203 = vmatpush1.msra.mxu0 %v963
    %1204 = vmatprep.subr.mxu0 %v1057
    %1205 = vmatpush2.msra.mxu0 %v1056
    %1206 = vmatprep.subr.mxu0 %v1054
    %1207 = vmatpush2.msra.mxu0 %v1053
    %1208 = vmatprep.subr.mxu0 %v1051
    %1209 = vmatpush2.msra.mxu0 %v1050
    %1210 = vmatprep.subr.mxu0 %v1048
    %1211 = vmatpush2.msra.mxu0 %v1047
    %1212 = vmatprep.subr.mxu0 %v1045
    %1213 = vmatpush2.msra.mxu0 %v1044
    %1214 = vmatprep.subr.mxu0 %v1042
    %1215 = vmatpush2.msra.mxu0 %v1041
    %1216 = vmatprep.subr.mxu0 %v1039
    %1217 = vmatpush2.msra.mxu0 %v1038
    %1218 = vmatprep.subr.mxu0 %v1036
    %1219 = vmatpush2.msra.mxu0 %v1035
    %1220 = vmatprep.subr.mxu0 %v1033
    %1221 = vmatpush2.msra.mxu0 %v1032
    %1222 = vmatprep.subr.mxu0 %v1030
    %1223 = vmatpush2.msra.mxu0 %v1029
    %1224 = vmatprep.subr.mxu0 %v1027
    %1225 = vmatpush2.msra.mxu0 %v1026
    %1226 = vmatprep.subr.mxu0 %v1024
    %1227 = vmatpush2.msra.mxu0 %v1023
    %1228 = vmatprep.subr.mxu0 %v1021
    %1229 = vmatpush2.msra.mxu0 %v1020
    %1230 = vmatprep.subr.mxu0 %v1018
    %1231 = vmatpush2.msra.mxu0 %v1017
    %1232 = vmatprep.subr.mxu0 %v1015
    %1233 = vmatpush2.msra.mxu0 %v1014
    %1234 = vmatprep.subr.mxu0 %v1012
    %1235 = vmatpush2.msra.mxu0 %v1011
    %1236 = vmatprep.mubr.f32.mxu0 %v960
    %1237 = vmatmul.mubr.f32.gmra.mxu0 %v959
    %v1238 = vpop.f32.mrf.mxu0
    %v1239 = vadd.f32 %v1160, %v1238
    %v1240 = vpop.f32.mrf.mxu0
    %v1241 = vadd.f32 %v1164, %v1240
    %1242 = vdwg.mxu0
    %1243 = vmatprep.subr.mxu0 %v1105
    %1244 = vmatpush1.msra.mxu0 %v1104
    %1245 = vmatprep.subr.mxu0 %v1102
    %1246 = vmatpush1.msra.mxu0 %v1101
    %1247 = vmatprep.subr.mxu0 %v1099
    %1248 = vmatpush1.msra.mxu0 %v1098
    %1249 = vmatprep.subr.mxu0 %v1096
    %1250 = vmatpush1.msra.mxu0 %v1095
    %1251 = vmatprep.subr.mxu0 %v1093
    %1252 = vmatpush1.msra.mxu0 %v1092
    %1253 = vmatprep.subr.mxu0 %v1090
    %1254 = vmatpush1.msra.mxu0 %v1089
    %1255 = vmatprep.subr.mxu0 %v1087
    %1256 = vmatpush1.msra.mxu0 %v1086
    %1257 = vmatprep.subr.mxu0 %v1084
    %1258 = vmatpush1.msra.mxu0 %v1083
    %1259 = vmatprep.subr.mxu0 %v1081
    %1260 = vmatpush1.msra.mxu0 %v1080
    %1261 = vmatprep.subr.mxu0 %v1078
    %1262 = vmatpush1.msra.mxu0 %v1077
    %1263 = vmatprep.subr.mxu0 %v1075
    %1264 = vmatpush1.msra.mxu0 %v1074
    %1265 = vmatprep.subr.mxu0 %v1072
    %1266 = vmatpush1.msra.mxu0 %v1071
    %1267 = vmatprep.subr.mxu0 %v1069
    %1268 = vmatpush1.msra.mxu0 %v1068
    %1269 = vmatprep.subr.mxu0 %v1066
    %1270 = vmatpush1.msra.mxu0 %v1065
    %1271 = vmatprep.subr.mxu0 %v1063
    %1272 = vmatpush1.msra.mxu0 %v1062
    %1273 = vmatprep.subr.mxu0 %v1060
    %1274 = vmatpush1.msra.mxu0 %v1059
    %1275 = vmatprep.subr.mxu0 %v1153
    %1276 = vmatpush2.msra.mxu0 %v1152
    %1277 = vmatprep.subr.mxu0 %v1150
    %1278 = vmatpush2.msra.mxu0 %v1149
    %1279 = vmatprep.subr.mxu0 %v1147
    %1280 = vmatpush2.msra.mxu0 %v1146
    %1281 = vmatprep.subr.mxu0 %v1144
    %1282 = vmatpush2.msra.mxu0 %v1143
    %1283 = vmatprep.subr.mxu0 %v1141
    %1284 = vmatpush2.msra.mxu0 %v1140
    %1285 = vmatprep.subr.mxu0 %v1138
    %1286 = vmatpush2.msra.mxu0 %v1137
    %1287 = vmatprep.subr.mxu0 %v1135
    %1288 = vmatpush2.msra.mxu0 %v1134
    %1289 = vmatprep.subr.mxu0 %v1132
    %1290 = vmatpush2.msra.mxu0 %v1131
    %1291 = vmatprep.subr.mxu0 %v1129
    %1292 = vmatpush2.msra.mxu0 %v1128
    %1293 = vmatprep.subr.mxu0 %v1126
    %1294 = vmatpush2.msra.mxu0 %v1125
    %1295 = vmatprep.subr.mxu0 %v1123
    %1296 = vmatpush2.msra.mxu0 %v1122
    %1297 = vmatprep.subr.mxu0 %v1120
    %1298 = vmatpush2.msra.mxu0 %v1119
    %1299 = vmatprep.subr.mxu0 %v1117
    %1300 = vmatpush2.msra.mxu0 %v1116
    %1301 = vmatprep.subr.mxu0 %v1114
    %1302 = vmatpush2.msra.mxu0 %v1113
    %1303 = vmatprep.subr.mxu0 %v1111
    %1304 = vmatpush2.msra.mxu0 %v1110
    %1305 = vmatprep.subr.mxu0 %v1108
    %1306 = vmatpush2.msra.mxu0 %v1107
    %1307 = vmatprep.mubr.f32.mxu0 %v962
    %1308 = vmatmul.mubr.f32.gmra.mxu0 %v961
    %v1309 = vpop.f32.mrf.mxu0
    %v1310 = vadd.f32 %v1239, %v1309
    %v1311 = vpop.f32.mrf.mxu0
    %v1312 = vadd.f32 %v1241, %v1311
    %1313 = vdwg.mxu0
    %1314 = vmatprep.subr.mxu0 0.0
    %1315 = vmatpush1.msra.mxu0 %v1010
    %1316 = vmatprep.subr.mxu0 0.0
    %1317 = vmatpush1.msra.mxu0 %v1007
    %1318 = vmatprep.subr.mxu0 0.0
    %1319 = vmatpush1.msra.mxu0 %v1004
    %1320 = vmatprep.subr.mxu0 0.0
    %1321 = vmatpush1.msra.mxu0 %v1001
    %1322 = vmatprep.subr.mxu0 0.0
    %1323 = vmatpush1.msra.mxu0 %v998
    %1324 = vmatprep.subr.mxu0 0.0
    %1325 = vmatpush1.msra.mxu0 %v995
    %1326 = vmatprep.subr.mxu0 0.0
    %1327 = vmatpush1.msra.mxu0 %v992
    %1328 = vmatprep.subr.mxu0 0.0
    %1329 = vmatpush1.msra.mxu0 %v989
    %1330 = vmatprep.subr.mxu0 0.0
    %1331 = vmatpush1.msra.mxu0 %v986
    %1332 = vmatprep.subr.mxu0 0.0
    %1333 = vmatpush1.msra.mxu0 %v983
    %1334 = vmatprep.subr.mxu0 0.0
    %1335 = vmatpush1.msra.mxu0 %v980
    %1336 = vmatprep.subr.mxu0 0.0
    %1337 = vmatpush1.msra.mxu0 %v977
    %1338 = vmatprep.subr.mxu0 0.0
    %1339 = vmatpush1.msra.mxu0 %v974
    %1340 = vmatprep.subr.mxu0 0.0
    %1341 = vmatpush1.msra.mxu0 %v971
    %1342 = vmatprep.subr.mxu0 0.0
    %1343 = vmatpush1.msra.mxu0 %v968
    %1344 = vmatprep.subr.mxu0 0.0
    %1345 = vmatpush1.msra.mxu0 %v965
    %1346 = vmatprep.subr.mxu0 0.0
    %1347 = vmatpush2.msra.mxu0 %v1058
    %1348 = vmatprep.subr.mxu0 0.0
    %1349 = vmatpush2.msra.mxu0 %v1055
    %1350 = vmatprep.subr.mxu0 0.0
    %1351 = vmatpush2.msra.mxu0 %v1052
    %1352 = vmatprep.subr.mxu0 0.0
    %1353 = vmatpush2.msra.mxu0 %v1049
    %1354 = vmatprep.subr.mxu0 0.0
    %1355 = vmatpush2.msra.mxu0 %v1046
    %1356 = vmatprep.subr.mxu0 0.0
    %1357 = vmatpush2.msra.mxu0 %v1043
    %1358 = vmatprep.subr.mxu0 0.0
    %1359 = vmatpush2.msra.mxu0 %v1040
    %1360 = vmatprep.subr.mxu0 0.0
    %1361 = vmatpush2.msra.mxu0 %v1037
    %1362 = vmatprep.subr.mxu0 0.0
    %1363 = vmatpush2.msra.mxu0 %v1034
    %1364 = vmatprep.subr.mxu0 0.0
    %1365 = vmatpush2.msra.mxu0 %v1031
    %1366 = vmatprep.subr.mxu0 0.0
    %1367 = vmatpush2.msra.mxu0 %v1028
    %1368 = vmatprep.subr.mxu0 0.0
    %1369 = vmatpush2.msra.mxu0 %v1025
    %1370 = vmatprep.subr.mxu0 0.0
    %1371 = vmatpush2.msra.mxu0 %v1022
    %1372 = vmatprep.subr.mxu0 0.0
    %1373 = vmatpush2.msra.mxu0 %v1019
    %1374 = vmatprep.subr.mxu0 0.0
    %1375 = vmatpush2.msra.mxu0 %v1016
    %1376 = vmatprep.subr.mxu0 0.0
    %1377 = vmatpush2.msra.mxu0 %v1013
    %1378 = vmatprep.mubr.f32.mxu0 %v960
    %1379 = vmatmul.mubr.f32.gmra.mxu0 %v959
    %v1380 = vpop.f32.mrf.mxu0
    %v1381 = vadd.f32 %v1168, %v1380
    %v1382 = vpop.f32.mrf.mxu0
    %1383 = vdwg.mxu0
    %1384 = vmatprep.subr.mxu0 0.0
    %1385 = vmatpush1.msra.mxu0 %v1106
    %1386 = vmatprep.subr.mxu0 0.0
    %1387 = vmatpush1.msra.mxu0 %v1103
    %1388 = vmatprep.subr.mxu0 0.0
    %1389 = vmatpush1.msra.mxu0 %v1100
    %1390 = vmatprep.subr.mxu0 0.0
    %1391 = vmatpush1.msra.mxu0 %v1097
    %1392 = vmatprep.subr.mxu0 0.0
    %1393 = vmatpush1.msra.mxu0 %v1094
    %1394 = vmatprep.subr.mxu0 0.0
    %1395 = vmatpush1.msra.mxu0 %v1091
    %1396 = vmatprep.subr.mxu0 0.0
    %1397 = vmatpush1.msra.mxu0 %v1088
    %1398 = vmatprep.subr.mxu0 0.0
    %1399 = vmatpush1.msra.mxu0 %v1085
    %1400 = vmatprep.subr.mxu0 0.0
    %1401 = vmatpush1.msra.mxu0 %v1082
    %1402 = vmatprep.subr.mxu0 0.0
    %1403 = vmatpush1.msra.mxu0 %v1079
    %1404 = vmatprep.subr.mxu0 0.0
    %1405 = vmatpush1.msra.mxu0 %v1076
    %1406 = vmatprep.subr.mxu0 0.0
    %1407 = vmatpush1.msra.mxu0 %v1073
    %1408 = vmatprep.subr.mxu0 0.0
    %1409 = vmatpush1.msra.mxu0 %v1070
    %1410 = vmatprep.subr.mxu0 0.0
    %1411 = vmatpush1.msra.mxu0 %v1067
    %1412 = vmatprep.subr.mxu0 0.0
    %1413 = vmatpush1.msra.mxu0 %v1064
    %1414 = vmatprep.subr.mxu0 0.0
    %1415 = vmatpush1.msra.mxu0 %v1061
    %1416 = vmatprep.subr.mxu0 0.0
    %1417 = vmatpush2.msra.mxu0 %v1154
    %1418 = vmatprep.subr.mxu0 0.0
    %1419 = vmatpush2.msra.mxu0 %v1151
    %1420 = vmatprep.subr.mxu0 0.0
    %1421 = vmatpush2.msra.mxu0 %v1148
    %1422 = vmatprep.subr.mxu0 0.0
    %1423 = vmatpush2.msra.mxu0 %v1145
    %1424 = vmatprep.subr.mxu0 0.0
    %1425 = vmatpush2.msra.mxu0 %v1142
    %1426 = vmatprep.subr.mxu0 0.0
    %1427 = vmatpush2.msra.mxu0 %v1139
    %1428 = vmatprep.subr.mxu0 0.0
    %1429 = vmatpush2.msra.mxu0 %v1136
    %1430 = vmatprep.subr.mxu0 0.0
    %1431 = vmatpush2.msra.mxu0 %v1133
    %1432 = vmatprep.subr.mxu0 0.0
    %1433 = vmatpush2.msra.mxu0 %v1130
    %1434 = vmatprep.subr.mxu0 0.0
    %1435 = vmatpush2.msra.mxu0 %v1127
    %1436 = vmatprep.subr.mxu0 0.0
    %1437 = vmatpush2.msra.mxu0 %v1124
    %1438 = vmatprep.subr.mxu0 0.0
    %1439 = vmatpush2.msra.mxu0 %v1121
    %1440 = vmatprep.subr.mxu0 0.0
    %1441 = vmatpush2.msra.mxu0 %v1118
    %1442 = vmatprep.subr.mxu0 0.0
    %1443 = vmatpush2.msra.mxu0 %v1115
    %1444 = vmatprep.subr.mxu0 0.0
    %1445 = vmatpush2.msra.mxu0 %v1112
    %1446 = vmatprep.subr.mxu0 0.0
    %1447 = vmatpush2.msra.mxu0 %v1109
    %1448 = vmatprep.mubr.f32.mxu0 %v962
    %1449 = vmatmul.mubr.f32.gmra.mxu0 %v961
    %v1450 = vpop.f32.mrf.mxu0
    %v1451 = vadd.f32 %v1381, %v1450
    %v1452 = vpop.f32.mrf.mxu0
    %1453 = vdwg.mxu0
    %vm1454 = vcmp.ge.f32.partialorder %v1310, 0.0
    %vm1455 = vcmp.ge.f32.partialorder %v1312, 0.0
    %vm1456 = vcmp.ge.f32.partialorder %v1451, 0.0
    %v1457 = vmul.f32 %v1310, 0.01
    %v1458 = vmul.f32 %v1312, 0.01
    %v1459 = vmul.f32 %v1451, 0.01
    %v1460 = vsel %vm1454, %v1310, %v1457
    %v1461 = vsel %vm1455, %v1312, %v1458
    %v1462 = vsel %vm1456, %v1451, %v1459
    %v1463 = vld [vmem:[#allocation11] sm:$0xff]
    %v1464 = vld [vmem:[#allocation11 + $0x8] sm:$0xff]
    %v1465 = vld [vmem:[#allocation11 + $0x10] sm:$0xff]
    %v1466 = vld [vmem:[#allocation11 + $0x18] sm:$0xff]
    %v1467 = vld [vmem:[#allocation11 + $0x20] sm:$0xff]
    %v1468 = vld [vmem:[#allocation11 + $0x28] sm:$0xff]
    %v1469 = vld [vmem:[#allocation11 + $0x30] sm:$0xff]
    %v1470 = vld [vmem:[#allocation11 + $0x38] sm:$0xff]
    %v1471 = vld [vmem:[#allocation11 + $0x40] sm:$0xff]
    %v1472 = vld [vmem:[#allocation11 + $0x48] sm:$0xff]
    %v1473 = vld [vmem:[#allocation11 + $0x50] sm:$0xff]
    %v1474 = vld [vmem:[#allocation11 + $0x58] sm:$0xff]
    %v1475 = vld [vmem:[#allocation11 + $0x60] sm:$0xff]
    %v1476 = vld [vmem:[#allocation11 + $0x68] sm:$0xff]
    %v1477 = vld [vmem:[#allocation11 + $0x70] sm:$0xff]
    %v1478 = vld [vmem:[#allocation11 + $0x78] sm:$0xff]
    %v1479 = vld [vmem:[#allocation11 + $0x80] sm:$0xff]
    %v1480 = vld [vmem:[#allocation11 + $0x88] sm:$0xff]
    %v1481 = vld [vmem:[#allocation11 + $0x90] sm:$0xff]
    %v1482 = vld [vmem:[#allocation11 + $0x98] sm:$0xff]
    %v1483 = vld [vmem:[#allocation11 + $0xa0] sm:$0xff]
    %v1484 = vld [vmem:[#allocation11 + $0xa8] sm:$0xff]
    %v1485 = vld [vmem:[#allocation11 + $0xb0] sm:$0xff]
    %v1486 = vld [vmem:[#allocation11 + $0xb8] sm:$0xff]
    %v1487 = vld [vmem:[#allocation11 + $0xc0] sm:$0xff]
    %v1488 = vld [vmem:[#allocation11 + $0xc8] sm:$0xff]
    %v1489 = vld [vmem:[#allocation11 + $0xd0] sm:$0xff]
    %v1490 = vld [vmem:[#allocation11 + $0xd8] sm:$0xff]
    %v1491 = vld [vmem:[#allocation11 + $0xe0] sm:$0xff]
    %v1492 = vld [vmem:[#allocation11 + $0xe8] sm:$0xff]
    %v1493 = vld [vmem:[#allocation11 + $0xf0] sm:$0xff]
    %v1494 = vld [vmem:[#allocation11 + $0xf8] sm:$0xff]
    %v1495 = vld [vmem:[#allocation11 + $0x100] sm:$0xff]
    %v1496 = vld [vmem:[#allocation11 + $0x108] sm:$0xff]
    %v1497 = vld [vmem:[#allocation11 + $0x110] sm:$0xff]
    %v1498 = vld [vmem:[#allocation11 + $0x118] sm:$0xff]
    %v1499 = vld [vmem:[#allocation11 + $0x120] sm:$0xff]
    %v1500 = vld [vmem:[#allocation11 + $0x128] sm:$0xff]
    %v1501 = vld [vmem:[#allocation11 + $0x130] sm:$0xff]
    %v1502 = vld [vmem:[#allocation11 + $0x138] sm:$0xff]
    %v1503 = vld [vmem:[#allocation11 + $0x140] sm:$0xff]
    %v1504 = vld [vmem:[#allocation11 + $0x148] sm:$0xff]
    %v1505 = vld [vmem:[#allocation11 + $0x150] sm:$0xff]
    %v1506 = vld [vmem:[#allocation11 + $0x158] sm:$0xff]
    %v1507 = vld [vmem:[#allocation11 + $0x160] sm:$0xff]
    %v1508 = vld [vmem:[#allocation11 + $0x168] sm:$0xff]
    %v1509 = vld [vmem:[#allocation11 + $0x170] sm:$0xff]
    %v1510 = vld [vmem:[#allocation11 + $0x178] sm:$0xff]
    %v1511 = vld [vmem:[#allocation11 + $0x180] sm:$0xff]
    %v1512 = vld [vmem:[#allocation11 + $0x188] sm:$0xff]
    %v1513 = vld [vmem:[#allocation11 + $0x190] sm:$0xff]
    %v1514 = vld [vmem:[#allocation11 + $0x198] sm:$0xff]
    %v1515 = vld [vmem:[#allocation11 + $0x1a0] sm:$0xff]
    %v1516 = vld [vmem:[#allocation11 + $0x1a8] sm:$0xff]
    %v1517 = vld [vmem:[#allocation11 + $0x1b0] sm:$0xff]
    %v1518 = vld [vmem:[#allocation11 + $0x1b8] sm:$0xff]
    %v1519 = vld [vmem:[#allocation11 + $0x1c0] sm:$0xff]
    %v1520 = vld [vmem:[#allocation11 + $0x1c8] sm:$0xff]
    %v1521 = vld [vmem:[#allocation11 + $0x1d0] sm:$0xff]
    %v1522 = vld [vmem:[#allocation11 + $0x1d8] sm:$0xff]
    %v1523 = vld [vmem:[#allocation11 + $0x1e0] sm:$0xff]
    %v1524 = vld [vmem:[#allocation11 + $0x1e8] sm:$0xff]
    %v1525 = vld [vmem:[#allocation11 + $0x1f0] sm:$0xff]
    %v1526 = vld [vmem:[#allocation11 + $0x1f8] sm:$0xff]
    %v1527 = vld [vmem:[#allocation11 + $0x200] sm:$0xff]
    %v1528 = vld [vmem:[#allocation11 + $0x208] sm:$0xff]
    %v1529 = vld [vmem:[#allocation11 + $0x210] sm:$0xff]
    %v1530 = vld [vmem:[#allocation11 + $0x218] sm:$0xff]
    %v1531 = vld [vmem:[#allocation11 + $0x220] sm:$0xff]
    %v1532 = vld [vmem:[#allocation11 + $0x228] sm:$0xff]
    %v1533 = vld [vmem:[#allocation11 + $0x230] sm:$0xff]
    %v1534 = vld [vmem:[#allocation11 + $0x238] sm:$0xff]
    %v1535 = vld [vmem:[#allocation11 + $0x240] sm:$0xff]
    %v1536 = vld [vmem:[#allocation11 + $0x248] sm:$0xff]
    %v1537 = vld [vmem:[#allocation11 + $0x250] sm:$0xff]
    %v1538 = vld [vmem:[#allocation11 + $0x258] sm:$0xff]
    %v1539 = vld [vmem:[#allocation11 + $0x260] sm:$0xff]
    %v1540 = vld [vmem:[#allocation11 + $0x268] sm:$0xff]
    %v1541 = vld [vmem:[#allocation11 + $0x270] sm:$0xff]
    %v1542 = vld [vmem:[#allocation11 + $0x278] sm:$0xff]
    %v1543 = vld [vmem:[#allocation11 + $0x280] sm:$0xff]
    %v1544 = vld [vmem:[#allocation11 + $0x288] sm:$0xff]
    %v1545 = vld [vmem:[#allocation11 + $0x290] sm:$0xff]
    %v1546 = vld [vmem:[#allocation11 + $0x298] sm:$0xff]
    %v1547 = vld [vmem:[#allocation11 + $0x2a0] sm:$0xff]
    %v1548 = vld [vmem:[#allocation11 + $0x2a8] sm:$0xff]
    %v1549 = vld [vmem:[#allocation11 + $0x2b0] sm:$0xff]
    %v1550 = vld [vmem:[#allocation11 + $0x2b8] sm:$0xff]
    %v1551 = vld [vmem:[#allocation11 + $0x2c0] sm:$0xff]
    %v1552 = vld [vmem:[#allocation11 + $0x2c8] sm:$0xff]
    %v1553 = vld [vmem:[#allocation11 + $0x2d0] sm:$0xff]
    %v1554 = vld [vmem:[#allocation11 + $0x2d8] sm:$0xff]
    %v1555 = vld [vmem:[#allocation11 + $0x2e0] sm:$0xff]
    %v1556 = vld [vmem:[#allocation11 + $0x2e8] sm:$0xff]
    %v1557 = vld [vmem:[#allocation11 + $0x2f0] sm:$0xff]
    %v1558 = vld [vmem:[#allocation11 + $0x2f8] sm:$0xff]
    %v1559 = vld [vmem:[#allocation13] sm:$0x3]
    %v1561 = vlaneseq
    %v1562 = vshrl.u32 %v1561, 7
    %v1563 = vsub.s32 0, %v1562
    %v1564 = vrot.slane %v1559, %v1563
    %v1565 = vlaneseq
    %v1566 = vshrl.u32 %v1565, 7
    %v1567 = vsub.s32 1, %v1566
    %v1568 = vrot.slane %v1559, %v1567
    %1571 = vmatprep.subr.mxu0 %v1494
    %1572 = vmatpush1.msra.mxu0 %v1493
    %1573 = vmatprep.subr.mxu0 %v1492
    %1574 = vmatpush1.msra.mxu0 %v1491
    %1575 = vmatprep.subr.mxu0 %v1490
    %1576 = vmatpush1.msra.mxu0 %v1489
    %1577 = vmatprep.subr.mxu0 %v1488
    %1578 = vmatpush1.msra.mxu0 %v1487
    %1579 = vmatprep.subr.mxu0 %v1486
    %1580 = vmatpush1.msra.mxu0 %v1485
    %1581 = vmatprep.subr.mxu0 %v1484
    %1582 = vmatpush1.msra.mxu0 %v1483
    %1583 = vmatprep.subr.mxu0 %v1482
    %1584 = vmatpush1.msra.mxu0 %v1481
    %1585 = vmatprep.subr.mxu0 %v1480
    %1586 = vmatpush1.msra.mxu0 %v1479
    %1587 = vmatprep.subr.mxu0 %v1478
    %1588 = vmatpush1.msra.mxu0 %v1477
    %1589 = vmatprep.subr.mxu0 %v1476
    %1590 = vmatpush1.msra.mxu0 %v1475
    %1591 = vmatprep.subr.mxu0 %v1474
    %1592 = vmatpush1.msra.mxu0 %v1473
    %1593 = vmatprep.subr.mxu0 %v1472
    %1594 = vmatpush1.msra.mxu0 %v1471
    %1595 = vmatprep.subr.mxu0 %v1470
    %1596 = vmatpush1.msra.mxu0 %v1469
    %1597 = vmatprep.subr.mxu0 %v1468
    %1598 = vmatpush1.msra.mxu0 %v1467
    %1599 = vmatprep.subr.mxu0 %v1466
    %1600 = vmatpush1.msra.mxu0 %v1465
    %1601 = vmatprep.subr.mxu0 %v1464
    %1602 = vmatpush1.msra.mxu0 %v1463
    %1603 = vmatprep.subr.mxu0 %v1526
    %1604 = vmatpush2.msra.mxu0 %v1525
    %1605 = vmatprep.subr.mxu0 %v1524
    %1606 = vmatpush2.msra.mxu0 %v1523
    %1607 = vmatprep.subr.mxu0 %v1522
    %1608 = vmatpush2.msra.mxu0 %v1521
    %1609 = vmatprep.subr.mxu0 %v1520
    %1610 = vmatpush2.msra.mxu0 %v1519
    %1611 = vmatprep.subr.mxu0 %v1518
    %1612 = vmatpush2.msra.mxu0 %v1517
    %1613 = vmatprep.subr.mxu0 %v1516
    %1614 = vmatpush2.msra.mxu0 %v1515
    %1615 = vmatprep.subr.mxu0 %v1514
    %1616 = vmatpush2.msra.mxu0 %v1513
    %1617 = vmatprep.subr.mxu0 %v1512
    %1618 = vmatpush2.msra.mxu0 %v1511
    %1619 = vmatprep.subr.mxu0 %v1510
    %1620 = vmatpush2.msra.mxu0 %v1509
    %1621 = vmatprep.subr.mxu0 %v1508
    %1622 = vmatpush2.msra.mxu0 %v1507
    %1623 = vmatprep.subr.mxu0 %v1506
    %1624 = vmatpush2.msra.mxu0 %v1505
    %1625 = vmatprep.subr.mxu0 %v1504
    %1626 = vmatpush2.msra.mxu0 %v1503
    %1627 = vmatprep.subr.mxu0 %v1502
    %1628 = vmatpush2.msra.mxu0 %v1501
    %1629 = vmatprep.subr.mxu0 %v1500
    %1630 = vmatpush2.msra.mxu0 %v1499
    %1631 = vmatprep.subr.mxu0 %v1498
    %1632 = vmatpush2.msra.mxu0 %v1497
    %1633 = vmatprep.subr.mxu0 %v1496
    %1634 = vmatpush2.msra.mxu0 %v1495
    %1635 = vmatprep.mubr.f32.mxu0 %v1461
    %1636 = vmatmul.mubr.f32.gmra.mxu0 %v1460
    %v1637 = vpop.f32.mrf.mxu0
    %v1638 = vadd.f32 %v1564, %v1637
    %v1639 = vpop.f32.mrf.mxu0
    %v1640 = vadd.f32 %v1568, %v1639
    %1641 = vdwg.mxu0
    %1642 = vmatprep.subr.mxu0 %v1558
    %1643 = vmatpush1.msra.mxu0 %v1557
    %1644 = vmatprep.subr.mxu0 %v1556
    %1645 = vmatpush1.msra.mxu0 %v1555
    %1646 = vmatprep.subr.mxu0 %v1554
    %1647 = vmatpush1.msra.mxu0 %v1553
    %1648 = vmatprep.subr.mxu0 %v1552
    %1649 = vmatpush1.msra.mxu0 %v1551
    %1650 = vmatprep.subr.mxu0 %v1550
    %1651 = vmatpush1.msra.mxu0 %v1549
    %1652 = vmatprep.subr.mxu0 %v1548
    %1653 = vmatpush1.msra.mxu0 %v1547
    %1654 = vmatprep.subr.mxu0 %v1546
    %1655 = vmatpush1.msra.mxu0 %v1545
    %1656 = vmatprep.subr.mxu0 %v1544
    %1657 = vmatpush1.msra.mxu0 %v1543
    %1658 = vmatprep.subr.mxu0 %v1542
    %1659 = vmatpush1.msra.mxu0 %v1541
    %1660 = vmatprep.subr.mxu0 %v1540
    %1661 = vmatpush1.msra.mxu0 %v1539
    %1662 = vmatprep.subr.mxu0 %v1538
    %1663 = vmatpush1.msra.mxu0 %v1537
    %1664 = vmatprep.subr.mxu0 %v1536
    %1665 = vmatpush1.msra.mxu0 %v1535
    %1666 = vmatprep.subr.mxu0 %v1534
    %1667 = vmatpush1.msra.mxu0 %v1533
    %1668 = vmatprep.subr.mxu0 %v1532
    %1669 = vmatpush1.msra.mxu0 %v1531
    %1670 = vmatprep.subr.mxu0 %v1530
    %1671 = vmatpush1.msra.mxu0 %v1529
    %1672 = vmatprep.subr.mxu0 %v1528
    %1673 = vmatpush1.msra.mxu0 %v1527
    %1674 = vmatprep.subr.mxu0 0.0
    %1675 = vmatpush2.msra.mxu0 0.0
    %1676 = vmatprep.subr.mxu0 0.0
    %1677 = vmatpush2.msra.mxu0 0.0
    %1678 = vmatprep.subr.mxu0 0.0
    %1679 = vmatpush2.msra.mxu0 0.0
    %1680 = vmatprep.subr.mxu0 0.0
    %1681 = vmatpush2.msra.mxu0 0.0
    %1682 = vmatprep.subr.mxu0 0.0
    %1683 = vmatpush2.msra.mxu0 0.0
    %1684 = vmatprep.subr.mxu0 0.0
    %1685 = vmatpush2.msra.mxu0 0.0
    %1686 = vmatprep.subr.mxu0 0.0
    %1687 = vmatpush2.msra.mxu0 0.0
    %1688 = vmatprep.subr.mxu0 0.0
    %1689 = vmatpush2.msra.mxu0 0.0
    %1690 = vmatprep.subr.mxu0 0.0
    %1691 = vmatpush2.msra.mxu0 0.0
    %1692 = vmatprep.subr.mxu0 0.0
    %1693 = vmatpush2.msra.mxu0 0.0
    %1694 = vmatprep.subr.mxu0 0.0
    %1695 = vmatpush2.msra.mxu0 0.0
    %1696 = vmatprep.subr.mxu0 0.0
    %1697 = vmatpush2.msra.mxu0 0.0
    %1698 = vmatprep.subr.mxu0 0.0
    %1699 = vmatpush2.msra.mxu0 0.0
    %1700 = vmatprep.subr.mxu0 0.0
    %1701 = vmatpush2.msra.mxu0 0.0
    %1702 = vmatprep.subr.mxu0 0.0
    %1703 = vmatpush2.msra.mxu0 0.0
    %1704 = vmatprep.subr.mxu0 0.0
    %1705 = vmatpush2.msra.mxu0 0.0
    %1706 = vmatprep.mubr.f32.mxu0 0.0
    %1707 = vmatmul.mubr.f32.gmra.mxu0 %v1462
    %v1708 = vpop.f32.mrf.mxu0
    %v1709 = vadd.f32 %v1638, %v1708
    %v1710 = vpop.f32.mrf.mxu0
    %v1711 = vadd.f32 %v1640, %v1710
    %1712 = vdwg.mxu0
    %vm1713 = vcmp.ge.f32.partialorder %v1709, 0.0
    %vm1714 = vcmp.ge.f32.partialorder %v1711, 0.0
    %v1715 = vmul.f32 %v1709, 0.01
    %v1716 = vmul.f32 %v1711, 0.01
    %v1717 = vsel %vm1713, %v1709, %v1715
    %v1718 = vsel %vm1714, %v1711, %v1716
    %v1719 = vld [vmem:[#allocation14] sm:$0xff]
    %v1720 = vld [vmem:[#allocation14 + $0x8] sm:$0xff]
    %v1721 = vld [vmem:[#allocation14 + $0x10] sm:$0xff]
    %v1722 = vld [vmem:[#allocation14 + $0x18] sm:$0xff]
    %v1723 = vld [vmem:[#allocation14 + $0x20] sm:$0xff]
    %v1724 = vld [vmem:[#allocation14 + $0x28] sm:$0xff]
    %v1725 = vld [vmem:[#allocation14 + $0x30] sm:$0xff]
    %v1726 = vld [vmem:[#allocation14 + $0x38] sm:$0xff]
    %v1727 = vld [vmem:[#allocation14 + $0x40] sm:$0xff]
    %v1728 = vld [vmem:[#allocation14 + $0x48] sm:$0xff]
    %v1729 = vld [vmem:[#allocation14 + $0x50] sm:$0xff]
    %v1730 = vld [vmem:[#allocation14 + $0x58] sm:$0xff]
    %v1731 = vld [vmem:[#allocation14 + $0x60] sm:$0xff]
    %v1732 = vld [vmem:[#allocation14 + $0x68] sm:$0xff]
    %v1733 = vld [vmem:[#allocation14 + $0x70] sm:$0xff]
    %v1734 = vld [vmem:[#allocation14 + $0x78] sm:$0xff]
    %v1735 = vld [vmem:[#allocation14 + $0x80] sm:$0xff]
    %v1736 = vld [vmem:[#allocation14 + $0x88] sm:$0xff]
    %v1737 = vld [vmem:[#allocation14 + $0x90] sm:$0xff]
    %v1738 = vld [vmem:[#allocation14 + $0x98] sm:$0xff]
    %v1739 = vld [vmem:[#allocation14 + $0xa0] sm:$0xff]
    %v1740 = vld [vmem:[#allocation14 + $0xa8] sm:$0xff]
    %v1741 = vld [vmem:[#allocation14 + $0xb0] sm:$0xff]
    %v1742 = vld [vmem:[#allocation14 + $0xb8] sm:$0xff]
    %v1743 = vld [vmem:[#allocation14 + $0xc0] sm:$0xff]
    %v1744 = vld [vmem:[#allocation14 + $0xc8] sm:$0xff]
    %v1745 = vld [vmem:[#allocation14 + $0xd0] sm:$0xff]
    %v1746 = vld [vmem:[#allocation14 + $0xd8] sm:$0xff]
    %v1747 = vld [vmem:[#allocation14 + $0xe0] sm:$0xff]
    %v1748 = vld [vmem:[#allocation14 + $0xe8] sm:$0xff]
    %v1749 = vld [vmem:[#allocation14 + $0xf0] sm:$0xff]
    %v1750 = vld [vmem:[#allocation14 + $0xf8] sm:$0xff]
    %v1751 = vld [vmem:[#allocation16] sm:$0x1]
    %v1753 = vlaneseq
    %v1754 = vshrl.u32 %v1753, 7
    %v1755 = vsub.s32 0, %v1754
    %v1756 = vrot.slane %v1751, %v1755
    %1758 = vmatprep.subr.mxu0 0.0
    %1759 = vmatpush1.msra.mxu0 %v1734
    %1760 = vmatprep.subr.mxu0 0.0
    %1761 = vmatpush1.msra.mxu0 %v1733
    %1762 = vmatprep.subr.mxu0 0.0
    %1763 = vmatpush1.msra.mxu0 %v1732
    %1764 = vmatprep.subr.mxu0 0.0
    %1765 = vmatpush1.msra.mxu0 %v1731
    %1766 = vmatprep.subr.mxu0 0.0
    %1767 = vmatpush1.msra.mxu0 %v1730
    %1768 = vmatprep.subr.mxu0 0.0
    %1769 = vmatpush1.msra.mxu0 %v1729
    %1770 = vmatprep.subr.mxu0 0.0
    %1771 = vmatpush1.msra.mxu0 %v1728
    %1772 = vmatprep.subr.mxu0 0.0
    %1773 = vmatpush1.msra.mxu0 %v1727
    %1774 = vmatprep.subr.mxu0 0.0
    %1775 = vmatpush1.msra.mxu0 %v1726
    %1776 = vmatprep.subr.mxu0 0.0
    %1777 = vmatpush1.msra.mxu0 %v1725
    %1778 = vmatprep.subr.mxu0 0.0
    %1779 = vmatpush1.msra.mxu0 %v1724
    %1780 = vmatprep.subr.mxu0 0.0
    %1781 = vmatpush1.msra.mxu0 %v1723
    %1782 = vmatprep.subr.mxu0 0.0
    %1783 = vmatpush1.msra.mxu0 %v1722
    %1784 = vmatprep.subr.mxu0 0.0
    %1785 = vmatpush1.msra.mxu0 %v1721
    %1786 = vmatprep.subr.mxu0 0.0
    %1787 = vmatpush1.msra.mxu0 %v1720
    %1788 = vmatprep.subr.mxu0 0.0
    %1789 = vmatpush1.msra.mxu0 %v1719
    %1790 = vmatprep.subr.mxu0 0.0
    %1791 = vmatpush2.msra.mxu0 %v1750
    %1792 = vmatprep.subr.mxu0 0.0
    %1793 = vmatpush2.msra.mxu0 %v1749
    %1794 = vmatprep.subr.mxu0 0.0
    %1795 = vmatpush2.msra.mxu0 %v1748
    %1796 = vmatprep.subr.mxu0 0.0
    %1797 = vmatpush2.msra.mxu0 %v1747
    %1798 = vmatprep.subr.mxu0 0.0
    %1799 = vmatpush2.msra.mxu0 %v1746
    %1800 = vmatprep.subr.mxu0 0.0
    %1801 = vmatpush2.msra.mxu0 %v1745
    %1802 = vmatprep.subr.mxu0 0.0
    %1803 = vmatpush2.msra.mxu0 %v1744
    %1804 = vmatprep.subr.mxu0 0.0
    %1805 = vmatpush2.msra.mxu0 %v1743
    %1806 = vmatprep.subr.mxu0 0.0
    %1807 = vmatpush2.msra.mxu0 %v1742
    %1808 = vmatprep.subr.mxu0 0.0
    %1809 = vmatpush2.msra.mxu0 %v1741
    %1810 = vmatprep.subr.mxu0 0.0
    %1811 = vmatpush2.msra.mxu0 %v1740
    %1812 = vmatprep.subr.mxu0 0.0
    %1813 = vmatpush2.msra.mxu0 %v1739
    %1814 = vmatprep.subr.mxu0 0.0
    %1815 = vmatpush2.msra.mxu0 %v1738
    %1816 = vmatprep.subr.mxu0 0.0
    %1817 = vmatpush2.msra.mxu0 %v1737
    %1818 = vmatprep.subr.mxu0 0.0
    %1819 = vmatpush2.msra.mxu0 %v1736
    %1820 = vmatprep.subr.mxu0 0.0
    %1821 = vmatpush2.msra.mxu0 %v1735
    %1822 = vmatprep.mubr.f32.mxu0 %v1718
    %1823 = vmatmul.mubr.f32.gmra.mxu0 %v1717
    %v1824 = vpop.f32.mrf.mxu0
    %v1825 = vadd.f32 %v1756, %v1824
    %v1826 = vpop.f32.mrf.mxu0
    %1827 = vdwg.mxu0
    %v1828 = vmax.f32 %v1825, -10.0
    %v1829 = vmin.f32 %v1828, 10.0
    %1830 = vst [vmem:[#allocation17] sm:$0xff] %v1829
    // Predicated region
    $region74: #{tpu_custom_call.1} parent=1 // pred_check
      _
    $region75: #{tpu_custom_call.1} parent=1 // pred_check_branch
      %1832 = sbr.rel (0) target = $region77
    $region76: #{tpu_custom_call.1} parent=1 // pred_region
      %s1834 = ssub.s32 128, 32
      %1835 = vsyncadd [#allocation4], %s1834
      %s1836 = sshll.u32 [#allocation17], 4
      %s1837 = int_to_ptr.vmem [resolvable:$true] %s1836
      %1842 = dma.vmem_to_hbm [thread:$0]  %s1837, 32, %s9, [#allocation4], 32, 32, 2
    $region77: #{tpu_custom_call.1} parent=1 // pred_fallthru
      _
    // Predicated region
    $region78: #{tpu_custom_call.1} parent=1 // pred_check
      _
    $region79: #{tpu_custom_call.1} parent=1 // pred_check_branch
      %1844 = sbr.rel (0) target = $region81
    $region80: #{tpu_custom_call.1} parent=1 // pred_region
      %1845 = dma.done [#allocation4], 128
    $region81: #{tpu_custom_call.1} parent=1 // pred_fallthru
      _
    %1846 = vsyncpa [#allocation3], 1
    %1847 = vsyncpa [#allocation6], 1
    %1848 = vsyncpa [#allocation9], 1
    %1849 = vsyncpa [#allocation12], 1
    %1850 = vsyncpa [#allocation15], 1
    %1851 = vsyncpa [#allocation4], 1

</llo_original>
